<compile_context>
chip_gen: v5e
topology: v5e:2x2
jax: 0.10.0
libtpu: 0.0.40
codegen_flags: <defaults>
</compile_context>

<pallas_src>
import functools

import jax
import jax.numpy as jnp
from jax.experimental import pallas as pl
from jax.experimental.pallas import tpu as pltpu


def _lstm_decoder_kernel(x_ref,
                         w_ih1_ref, w_hh1_ref, b1_ref,
                         w_ih2_ref, w_hh2_ref, b2_ref,
                         w_out_ref, b_out_ref,
                         out_ref,
                         *, seq_len, input_dim, hidden_dim):
    D, H = input_dim, hidden_dim
    x = x_ref[...]                       # (Bp, D) -- same latent at every time step
    Bp = x.shape[0]

    w_hh1 = w_hh1_ref[...]               # (D, 4D)
    w_ih2 = w_ih2_ref[...]               # (D, 4H)
    w_hh2 = w_hh2_ref[...]               # (H, 4H)

    # Hoisted loop-invariants: layer-1 input projection (x is constant over t)
    # and the layer-2 bias broadcast.
    xproj = jnp.dot(x, w_ih1_ref[...], preferred_element_type=jnp.float32) + b1_ref[...]
    b2b = jnp.broadcast_to(b2_ref[...], (Bp, 4 * H))

    h1 = jnp.zeros((Bp, D), jnp.float32)
    c1 = jnp.zeros((Bp, D), jnp.float32)
    h2 = jnp.zeros((Bp, H), jnp.float32)
    c2 = jnp.zeros((Bp, H), jnp.float32)

    h2_steps = []
    # seq_len is small & static -> fully unrolled straight-line code inside one
    # kernel invocation (state lives in vregs; no per-step grid/DMA overhead).
    for _ in range(seq_len):
        # ---- LSTM layer 1 (hidden = D); 4D = 128 lanes = one vreg ----
        g1 = xproj + jnp.dot(h1, w_hh1, preferred_element_type=jnp.float32)   # (Bp, 4D)
        s1 = jax.nn.sigmoid(g1)          # whole-vreg EUP pass
        t1 = jnp.tanh(g1)                # whole-vreg EUP pass
        c1 = s1[:, D:2 * D] * c1 + s1[:, 0:D] * t1[:, 2 * D:3 * D]
        h1 = s1[:, 3 * D:4 * D] * jnp.tanh(c1)

        # ---- LSTM layer 2 (hidden = H = 2D): two accumulating dots, no concat ----
        g2 = (jnp.dot(h1, w_ih2, preferred_element_type=jnp.float32)
              + jnp.dot(h2, w_hh2, preferred_element_type=jnp.float32)
              + b2b)                                                           # (Bp, 4H)
        # i,f live in lanes [0, 2H) (first vreg); g,o in lanes [2H, 4H) (second vreg).
        s_if = jax.nn.sigmoid(g2[:, 0:2 * H])      # sigmoid only where needed
        go = g2[:, 2 * H:4 * H]
        t_go = jnp.tanh(go)                        # g uses tanh
        s_go = jax.nn.sigmoid(go)                  # o uses sigmoid
        c2 = s_if[:, H:2 * H] * c2 + s_if[:, 0:H] * t_go[:, 0:H]
        h2 = s_go[:, H:2 * H] * jnp.tanh(c2)

        h2_steps.append(h2)

    # ---- Output head: sublane-stack all steps, one (T*Bp, H) @ (H, F) matmul ----
    h2_all = jnp.concatenate(h2_steps, axis=0)                                 # (T*Bp, H)
    out = (jnp.dot(h2_all, w_out_ref[...], preferred_element_type=jnp.float32)
           + b_out_ref[...])                                                   # (T*Bp, F)
    out_ref[...] = out                                                         # single store


def lstm_decoder_forward(x, params, *, seq_len):
    """x: (B, 1, D) latent (as in PyTorch forward). Returns (B, seq_len, n_features)."""
    B, one, D = x.shape
    assert one == 1
    H = params["w_hh2"].shape[0]            # hidden_dim
    assert H == 2 * D, "module spec: rnn1 hidden = input_dim, rnn2 hidden = 2*input_dim"
    F = params["w_out"].shape[1]            # n_features
    x2d = x[:, 0, :].astype(jnp.float32)    # (B, D)

    # Pad batch to a multiple of 8 sublanes; padded rows are dead work, sliced off below.
    Bp = ((B + 7) // 8) * 8
    if Bp != B:
        x2d = jnp.pad(x2d, ((0, Bp - B), (0, 0)))

    inputs = (
        x2d,
        params["w_ih1"], params["w_hh1"], params["b1"],
        params["w_ih2"], params["w_hh2"], params["b2"],
        params["w_out"], params["b_out"],
    )

    def full_spec(arr):
        # whole (small) 2-D array resident in VMEM
        return pl.BlockSpec(arr.shape, lambda i: (0, 0))

    grid_spec = pltpu.PrefetchScalarGridSpec(
        num_scalar_prefetch=0,
        grid=(1,),                                   # single invocation; recurrence in-kernel
        in_specs=[full_spec(a) for a in inputs],
        out_specs=pl.BlockSpec((seq_len * Bp, F), lambda i: (0, 0)),
    )

    kernel = functools.partial(_lstm_decoder_kernel,
                               seq_len=seq_len, input_dim=D, hidden_dim=H)
    out_tbf = pl.pallas_call(
        kernel,
        out_shape=jax.ShapeDtypeStruct((seq_len * Bp, F), jnp.float32),
        grid_spec=grid_spec,
        compiler_params=pltpu.CompilerParams(
            dimension_semantics=("arbitrary",)),     # recurrent; must stay sequential
    )(*inputs)

    # (T*Bp, F) -> (T, Bp, F) -> (Bp, T, F); drop batch padding (tiny XLA reshape).
    return jnp.transpose(out_tbf.reshape(seq_len, Bp, F), (1, 0, 2))[:B]


# ---------------- pure-JAX reference (for correctness check) ----------------
def _lstm_cell_ref(x, h, c, w_ih, w_hh, b, hid):
    g = x @ w_ih + h @ w_hh + b[0]
    i = jax.nn.sigmoid(g[:, 0 * hid:1 * hid])
    f = jax.nn.sigmoid(g[:, 1 * hid:2 * hid])
    gg = jnp.tanh(g[:, 2 * hid:3 * hid])
    o = jax.nn.sigmoid(g[:, 3 * hid:4 * hid])
    c = f * c + i * gg
    h = o * jnp.tanh(c)
    return h, c


def lstm_decoder_ref(x, params, *, seq_len):
    B, _, D = x.shape
    H = params["w_hh2"].shape[0]
    x2d = x[:, 0, :]
    h1 = jnp.zeros((B, D)); c1 = jnp.zeros((B, D))
    h2 = jnp.zeros((B, H)); c2 = jnp.zeros((B, H))
    outs = []
    for _ in range(seq_len):
        h1, c1 = _lstm_cell_ref(x2d, h1, c1, params["w_ih1"], params["w_hh1"], params["b1"], D)
        h2, c2 = _lstm_cell_ref(h1, h2, c2, params["w_ih2"], params["w_hh2"], params["b2"], H)
        outs.append(h2 @ params["w_out"] + params["b_out"][0])
    return jnp.stack(outs, axis=1)  # (B, T, F)


def init_params(key, input_dim, n_features):
    """Deterministic synthetic parameters matching nn.LSTM / nn.Linear shapes
    (weights stored pre-transposed as (in_dim, 4*hidden); b_ih+b_hh pre-summed)."""
    D, H = input_dim, 2 * input_dim
    ks = jax.random.split(key, 9)
    u = lambda k, shape, s: jax.random.uniform(k, shape, jnp.float32, -s, s)
    s1, s2, so = 1.0 / jnp.sqrt(D), 1.0 / jnp.sqrt(H), 1.0 / jnp.sqrt(H)
    return {
        "w_ih1": u(ks[0], (D, 4 * D), s1),
        "w_hh1": u(ks[1], (D, 4 * D), s1),
        "b1":    u(ks[2], (1, 4 * D), s1),
        "w_ih2": u(ks[3], (D, 4 * H), s2),
        "w_hh2": u(ks[4], (H, 4 * H), s2),
        "b2":    u(ks[5], (1, 4 * H), s2),
        "w_out": u(ks[6], (H, n_features), so),
        "b_out": u(ks[7], (1, n_features), so),
    }


if __name__ == "__main__":
    seq_len, input_dim, n_features, batch = 8, 32, 1, 4

    key = jax.random.PRNGKey(0)
    k_x, k_p = jax.random.split(key)
    params = init_params(k_p, input_dim, n_features)
    x = jax.random.normal(k_x, (batch, 1, input_dim), dtype=jnp.float32)

    out = lstm_decoder_forward(x, params, seq_len=seq_len)
    out = jax.block_until_ready(out)

    ref = lstm_decoder_ref(x, params, seq_len=seq_len)
    assert out.shape == (batch, seq_len, n_features)
    assert jnp.max(jnp.abs(out - ref)) < 5e-4, "kernel mismatch vs reference"

    print("KERNEL_OK")
</pallas_src>

<mosaic_0001>
module attributes {stable_mosaic.version = 11 : i64} {
  func.func @_lstm_decoder_kernel(%arg0: i32, %arg1: memref<8x32xf32, #tpu.memory_space<vmem>>, %arg2: memref<32x128xf32, #tpu.memory_space<vmem>>, %arg3: memref<32x128xf32, #tpu.memory_space<vmem>>, %arg4: memref<1x128xf32, #tpu.memory_space<vmem>>, %arg5: memref<32x256xf32, #tpu.memory_space<vmem>>, %arg6: memref<64x256xf32, #tpu.memory_space<vmem>>, %arg7: memref<1x256xf32, #tpu.memory_space<vmem>>, %arg8: memref<64x1xf32, #tpu.memory_space<vmem>>, %arg9: memref<1x1xf32, #tpu.memory_space<vmem>>, %arg10: memref<64x1xf32, #tpu.memory_space<vmem>>) attributes {dimension_semantics = [#tpu.dimension_semantics<arbitrary>], iteration_bounds = array<i64: 1>, scalar_prefetch = 0 : i64, scratch_operands = 0 : i64, tpu.core_type = #tpu.core_type<tc>, window_params = [{pipeline_mode = #tpu.pipeline_mode<synchronous>, transform_indices = @transform_0, window_bounds = array<i64: 8, 32>}, {pipeline_mode = #tpu.pipeline_mode<synchronous>, transform_indices = @transform_1, window_bounds = array<i64: 32, 128>}, {pipeline_mode = #tpu.pipeline_mode<synchronous>, transform_indices = @transform_2, window_bounds = array<i64: 32, 128>}, {pipeline_mode = #tpu.pipeline_mode<synchronous>, transform_indices = @transform_3, window_bounds = array<i64: 1, 128>}, {pipeline_mode = #tpu.pipeline_mode<synchronous>, transform_indices = @transform_4, window_bounds = array<i64: 32, 256>}, {pipeline_mode = #tpu.pipeline_mode<synchronous>, transform_indices = @transform_5, window_bounds = array<i64: 64, 256>}, {pipeline_mode = #tpu.pipeline_mode<synchronous>, transform_indices = @transform_6, window_bounds = array<i64: 1, 256>}, {pipeline_mode = #tpu.pipeline_mode<synchronous>, transform_indices = @transform_7, window_bounds = array<i64: 64, 1>}, {pipeline_mode = #tpu.pipeline_mode<synchronous>, transform_indices = @transform_8, window_bounds = array<i64: 1, 1>}, {pipeline_mode = #tpu.pipeline_mode<synchronous>, transform_indices = @transform_9, window_bounds = array<i64: 64, 1>}]} {
    %c0 = arith.constant 0 : index
    %c0_0 = arith.constant 0 : index
    %0 = vector.load %arg1[%c0, %c0_0] : memref<8x32xf32, #tpu.memory_space<vmem>>, vector<8x32xf32>
    %c0_1 = arith.constant 0 : index
    %c0_2 = arith.constant 0 : index
    %1 = vector.load %arg3[%c0_1, %c0_2] : memref<32x128xf32, #tpu.memory_space<vmem>>, vector<32x128xf32>
    %c0_3 = arith.constant 0 : index
    %c0_4 = arith.constant 0 : index
    %2 = vector.load %arg5[%c0_3, %c0_4] : memref<32x256xf32, #tpu.memory_space<vmem>>, vector<32x256xf32>
    %c0_5 = arith.constant 0 : index
    %c0_6 = arith.constant 0 : index
    %3 = vector.load %arg6[%c0_5, %c0_6] : memref<64x256xf32, #tpu.memory_space<vmem>>, vector<64x256xf32>
    %c0_7 = arith.constant 0 : index
    %c0_8 = arith.constant 0 : index
    %4 = vector.load %arg2[%c0_7, %c0_8] : memref<32x128xf32, #tpu.memory_space<vmem>>, vector<32x128xf32>
    %cst = arith.constant dense<0.000000e+00> : vector<8x128xf32>
    %5 = tpu.matmul %0, %4, %cst {dimension_numbers = #tpu.dot_dimension_numbers<[1], [0], [0], [1], [0, 0, 1, 1], [], []>} : vector<8x32xf32>, vector<32x128xf32>, vector<8x128xf32> -> vector<8x128xf32>
    %c0_9 = arith.constant 0 : index
    %c0_10 = arith.constant 0 : index
    %6 = vector.load %arg4[%c0_9, %c0_10] : memref<1x128xf32, #tpu.memory_space<vmem>>, vector<1x128xf32>
    %7 = vector.broadcast %6 : vector<1x128xf32> to vector<8x128xf32>
    %8 = arith.addf %5, %7 : vector<8x128xf32>
    %c0_11 = arith.constant 0 : index
    %c0_12 = arith.constant 0 : index
    %9 = vector.load %arg7[%c0_11, %c0_12] : memref<1x256xf32, #tpu.memory_space<vmem>>, vector<1x256xf32>
    %10 = vector.shape_cast %9 : vector<1x256xf32> to vector<1x256xf32>
    %11 = vector.broadcast %10 : vector<1x256xf32> to vector<8x256xf32>
    %cst_13 = arith.constant 0.000000e+00 : f32
    %12 = vector.broadcast %cst_13 : f32 to vector<8x32xf32>
    %cst_14 = arith.constant 0.000000e+00 : f32
    %13 = vector.broadcast %cst_14 : f32 to vector<8x32xf32>
    %cst_15 = arith.constant 0.000000e+00 : f32
    %14 = vector.broadcast %cst_15 : f32 to vector<8x64xf32>
    %cst_16 = arith.constant 0.000000e+00 : f32
    %15 = vector.broadcast %cst_16 : f32 to vector<8x64xf32>
    %cst_17 = arith.constant dense<0.000000e+00> : vector<8x128xf32>
    %16 = tpu.matmul %12, %1, %cst_17 {dimension_numbers = #tpu.dot_dimension_numbers<[1], [0], [0], [1], [0, 0, 1, 1], [], []>} : vector<8x32xf32>, vector<32x128xf32>, vector<8x128xf32> -> vector<8x128xf32>
    %17 = arith.addf %8, %16 : vector<8x128xf32>
    %18 = arith.negf %17 : vector<8x128xf32>
    %19 = math.exp %18 : vector<8x128xf32>
    %cst_18 = arith.constant 1.000000e+00 : f32
    %20 = vector.broadcast %cst_18 : f32 to vector<8x128xf32>
    %21 = arith.addf %20, %19 : vector<8x128xf32>
    %22 = arith.divf %20, %21 : vector<8x128xf32>
    %23 = math.tanh %17 : vector<8x128xf32>
    %24 = vector.extract_strided_slice %22 {offsets = [0, 32], sizes = [8, 32], strides = [1, 1]} : vector<8x128xf32> to vector<8x32xf32>
    %25 = arith.mulf %24, %13 : vector<8x32xf32>
    %26 = vector.extract_strided_slice %22 {offsets = [0, 0], sizes = [8, 32], strides = [1, 1]} : vector<8x128xf32> to vector<8x32xf32>
    %27 = vector.extract_strided_slice %23 {offsets = [0, 64], sizes = [8, 32], strides = [1, 1]} : vector<8x128xf32> to vector<8x32xf32>
    %28 = arith.mulf %26, %27 : vector<8x32xf32>
    %29 = arith.addf %25, %28 : vector<8x32xf32>
    %30 = vector.extract_strided_slice %22 {offsets = [0, 96], sizes = [8, 32], strides = [1, 1]} : vector<8x128xf32> to vector<8x32xf32>
    %31 = math.tanh %29 : vector<8x32xf32>
    %32 = arith.mulf %30, %31 : vector<8x32xf32>
    %cst_19 = arith.constant dense<0.000000e+00> : vector<8x256xf32>
    %33 = tpu.matmul %32, %2, %cst_19 {dimension_numbers = #tpu.dot_dimension_numbers<[1], [0], [0], [1], [0, 0, 1, 1], [], []>} : vector<8x32xf32>, vector<32x256xf32>, vector<8x256xf32> -> vector<8x256xf32>
    %cst_20 = arith.constant dense<0.000000e+00> : vector<8x256xf32>
    %34 = tpu.matmul %14, %3, %cst_20 {dimension_numbers = #tpu.dot_dimension_numbers<[1], [0], [0], [1], [0, 0, 1, 1], [], []>} : vector<8x64xf32>, vector<64x256xf32>, vector<8x256xf32> -> vector<8x256xf32>
    %35 = arith.addf %33, %34 : vector<8x256xf32>
    %36 = arith.addf %35, %11 : vector<8x256xf32>
    %37 = vector.extract_strided_slice %36 {offsets = [0, 0], sizes = [8, 128], strides = [1, 1]} : vector<8x256xf32> to vector<8x128xf32>
    %38 = arith.negf %37 : vector<8x128xf32>
    %39 = math.exp %38 : vector<8x128xf32>
    %cst_21 = arith.constant 1.000000e+00 : f32
    %40 = vector.broadcast %cst_21 : f32 to vector<8x128xf32>
    %41 = arith.addf %40, %39 : vector<8x128xf32>
    %42 = arith.divf %40, %41 : vector<8x128xf32>
    %43 = vector.extract_strided_slice %36 {offsets = [0, 128], sizes = [8, 128], strides = [1, 1]} : vector<8x256xf32> to vector<8x128xf32>
    %44 = math.tanh %43 : vector<8x128xf32>
    %45 = arith.negf %43 : vector<8x128xf32>
    %46 = math.exp %45 : vector<8x128xf32>
    %cst_22 = arith.constant 1.000000e+00 : f32
    %47 = vector.broadcast %cst_22 : f32 to vector<8x128xf32>
    %48 = arith.addf %47, %46 : vector<8x128xf32>
    %49 = arith.divf %47, %48 : vector<8x128xf32>
    %50 = vector.extract_strided_slice %42 {offsets = [0, 64], sizes = [8, 64], strides = [1, 1]} : vector<8x128xf32> to vector<8x64xf32>
    %51 = arith.mulf %50, %15 : vector<8x64xf32>
    %52 = vector.extract_strided_slice %42 {offsets = [0, 0], sizes = [8, 64], strides = [1, 1]} : vector<8x128xf32> to vector<8x64xf32>
    %53 = vector.extract_strided_slice %44 {offsets = [0, 0], sizes = [8, 64], strides = [1, 1]} : vector<8x128xf32> to vector<8x64xf32>
    %54 = arith.mulf %52, %53 : vector<8x64xf32>
    %55 = arith.addf %51, %54 : vector<8x64xf32>
    %56 = vector.extract_strided_slice %49 {offsets = [0, 64], sizes = [8, 64], strides = [1, 1]} : vector<8x128xf32> to vector<8x64xf32>
    %57 = math.tanh %55 : vector<8x64xf32>
    %58 = arith.mulf %56, %57 : vector<8x64xf32>
    %cst_23 = arith.constant dense<0.000000e+00> : vector<8x128xf32>
    %59 = tpu.matmul %32, %1, %cst_23 {dimension_numbers = #tpu.dot_dimension_numbers<[1], [0], [0], [1], [0, 0, 1, 1], [], []>} : vector<8x32xf32>, vector<32x128xf32>, vector<8x128xf32> -> vector<8x128xf32>
    %60 = arith.addf %8, %59 : vector<8x128xf32>
    %61 = arith.negf %60 : vector<8x128xf32>
    %62 = math.exp %61 : vector<8x128xf32>
    %cst_24 = arith.constant 1.000000e+00 : f32
    %63 = vector.broadcast %cst_24 : f32 to vector<8x128xf32>
    %64 = arith.addf %63, %62 : vector<8x128xf32>
    %65 = arith.divf %63, %64 : vector<8x128xf32>
    %66 = math.tanh %60 : vector<8x128xf32>
    %67 = vector.extract_strided_slice %65 {offsets = [0, 32], sizes = [8, 32], strides = [1, 1]} : vector<8x128xf32> to vector<8x32xf32>
    %68 = arith.mulf %67, %29 : vector<8x32xf32>
    %69 = vector.extract_strided_slice %65 {offsets = [0, 0], sizes = [8, 32], strides = [1, 1]} : vector<8x128xf32> to vector<8x32xf32>
    %70 = vector.extract_strided_slice %66 {offsets = [0, 64], sizes = [8, 32], strides = [1, 1]} : vector<8x128xf32> to vector<8x32xf32>
    %71 = arith.mulf %69, %70 : vector<8x32xf32>
    %72 = arith.addf %68, %71 : vector<8x32xf32>
    %73 = vector.extract_strided_slice %65 {offsets = [0, 96], sizes = [8, 32], strides = [1, 1]} : vector<8x128xf32> to vector<8x32xf32>
    %74 = math.tanh %72 : vector<8x32xf32>
    %75 = arith.mulf %73, %74 : vector<8x32xf32>
    %cst_25 = arith.constant dense<0.000000e+00> : vector<8x256xf32>
    %76 = tpu.matmul %75, %2, %cst_25 {dimension_numbers = #tpu.dot_dimension_numbers<[1], [0], [0], [1], [0, 0, 1, 1], [], []>} : vector<8x32xf32>, vector<32x256xf32>, vector<8x256xf32> -> vector<8x256xf32>
    %cst_26 = arith.constant dense<0.000000e+00> : vector<8x256xf32>
    %77 = tpu.matmul %58, %3, %cst_26 {dimension_numbers = #tpu.dot_dimension_numbers<[1], [0], [0], [1], [0, 0, 1, 1], [], []>} : vector<8x64xf32>, vector<64x256xf32>, vector<8x256xf32> -> vector<8x256xf32>
    %78 = arith.addf %76, %77 : vector<8x256xf32>
    %79 = arith.addf %78, %11 : vector<8x256xf32>
    %80 = vector.extract_strided_slice %79 {offsets = [0, 0], sizes = [8, 128], strides = [1, 1]} : vector<8x256xf32> to vector<8x128xf32>
    %81 = arith.negf %80 : vector<8x128xf32>
    %82 = math.exp %81 : vector<8x128xf32>
    %cst_27 = arith.constant 1.000000e+00 : f32
    %83 = vector.broadcast %cst_27 : f32 to vector<8x128xf32>
    %84 = arith.addf %83, %82 : vector<8x128xf32>
    %85 = arith.divf %83, %84 : vector<8x128xf32>
    %86 = vector.extract_strided_slice %79 {offsets = [0, 128], sizes = [8, 128], strides = [1, 1]} : vector<8x256xf32> to vector<8x128xf32>
    %87 = math.tanh %86 : vector<8x128xf32>
    %88 = arith.negf %86 : vector<8x128xf32>
    %89 = math.exp %88 : vector<8x128xf32>
    %cst_28 = arith.constant 1.000000e+00 : f32
    %90 = vector.broadcast %cst_28 : f32 to vector<8x128xf32>
    %91 = arith.addf %90, %89 : vector<8x128xf32>
    %92 = arith.divf %90, %91 : vector<8x128xf32>
    %93 = vector.extract_strided_slice %85 {offsets = [0, 64], sizes = [8, 64], strides = [1, 1]} : vector<8x128xf32> to vector<8x64xf32>
    %94 = arith.mulf %93, %55 : vector<8x64xf32>
    %95 = vector.extract_strided_slice %85 {offsets = [0, 0], sizes = [8, 64], strides = [1, 1]} : vector<8x128xf32> to vector<8x64xf32>
    %96 = vector.extract_strided_slice %87 {offsets = [0, 0], sizes = [8, 64], strides = [1, 1]} : vector<8x128xf32> to vector<8x64xf32>
    %97 = arith.mulf %95, %96 : vector<8x64xf32>
    %98 = arith.addf %94, %97 : vector<8x64xf32>
    %99 = vector.extract_strided_slice %92 {offsets = [0, 64], sizes = [8, 64], strides = [1, 1]} : vector<8x128xf32> to vector<8x64xf32>
    %100 = math.tanh %98 : vector<8x64xf32>
    %101 = arith.mulf %99, %100 : vector<8x64xf32>
    %cst_29 = arith.constant dense<0.000000e+00> : vector<8x128xf32>
    %102 = tpu.matmul %75, %1, %cst_29 {dimension_numbers = #tpu.dot_dimension_numbers<[1], [0], [0], [1], [0, 0, 1, 1], [], []>} : vector<8x32xf32>, vector<32x128xf32>, vector<8x128xf32> -> vector<8x128xf32>
    %103 = arith.addf %8, %102 : vector<8x128xf32>
    %104 = arith.negf %103 : vector<8x128xf32>
    %105 = math.exp %104 : vector<8x128xf32>
    %cst_30 = arith.constant 1.000000e+00 : f32
    %106 = vector.broadcast %cst_30 : f32 to vector<8x128xf32>
    %107 = arith.addf %106, %105 : vector<8x128xf32>
    %108 = arith.divf %106, %107 : vector<8x128xf32>
    %109 = math.tanh %103 : vector<8x128xf32>
    %110 = vector.extract_strided_slice %108 {offsets = [0, 32], sizes = [8, 32], strides = [1, 1]} : vector<8x128xf32> to vector<8x32xf32>
    %111 = arith.mulf %110, %72 : vector<8x32xf32>
    %112 = vector.extract_strided_slice %108 {offsets = [0, 0], sizes = [8, 32], strides = [1, 1]} : vector<8x128xf32> to vector<8x32xf32>
    %113 = vector.extract_strided_slice %109 {offsets = [0, 64], sizes = [8, 32], strides = [1, 1]} : vector<8x128xf32> to vector<8x32xf32>
    %114 = arith.mulf %112, %113 : vector<8x32xf32>
    %115 = arith.addf %111, %114 : vector<8x32xf32>
    %116 = vector.extract_strided_slice %108 {offsets = [0, 96], sizes = [8, 32], strides = [1, 1]} : vector<8x128xf32> to vector<8x32xf32>
    %117 = math.tanh %115 : vector<8x32xf32>
    %118 = arith.mulf %116, %117 : vector<8x32xf32>
    %cst_31 = arith.constant dense<0.000000e+00> : vector<8x256xf32>
    %119 = tpu.matmul %118, %2, %cst_31 {dimension_numbers = #tpu.dot_dimension_numbers<[1], [0], [0], [1], [0, 0, 1, 1], [], []>} : vector<8x32xf32>, vector<32x256xf32>, vector<8x256xf32> -> vector<8x256xf32>
    %cst_32 = arith.constant dense<0.000000e+00> : vector<8x256xf32>
    %120 = tpu.matmul %101, %3, %cst_32 {dimension_numbers = #tpu.dot_dimension_numbers<[1], [0], [0], [1], [0, 0, 1, 1], [], []>} : vector<8x64xf32>, vector<64x256xf32>, vector<8x256xf32> -> vector<8x256xf32>
    %121 = arith.addf %119, %120 : vector<8x256xf32>
    %122 = arith.addf %121, %11 : vector<8x256xf32>
    %123 = vector.extract_strided_slice %122 {offsets = [0, 0], sizes = [8, 128], strides = [1, 1]} : vector<8x256xf32> to vector<8x128xf32>
    %124 = arith.negf %123 : vector<8x128xf32>
    %125 = math.exp %124 : vector<8x128xf32>
    %cst_33 = arith.constant 1.000000e+00 : f32
    %126 = vector.broadcast %cst_33 : f32 to vector<8x128xf32>
    %127 = arith.addf %126, %125 : vector<8x128xf32>
    %128 = arith.divf %126, %127 : vector<8x128xf32>
    %129 = vector.extract_strided_slice %122 {offsets = [0, 128], sizes = [8, 128], strides = [1, 1]} : vector<8x256xf32> to vector<8x128xf32>
    %130 = math.tanh %129 : vector<8x128xf32>
    %131 = arith.negf %129 : vector<8x128xf32>
    %132 = math.exp %131 : vector<8x128xf32>
    %cst_34 = arith.constant 1.000000e+00 : f32
    %133 = vector.broadcast %cst_34 : f32 to vector<8x128xf32>
    %134 = arith.addf %133, %132 : vector<8x128xf32>
    %135 = arith.divf %133, %134 : vector<8x128xf32>
    %136 = vector.extract_strided_slice %128 {offsets = [0, 64], sizes = [8, 64], strides = [1, 1]} : vector<8x128xf32> to vector<8x64xf32>
    %137 = arith.mulf %136, %98 : vector<8x64xf32>
    %138 = vector.extract_strided_slice %128 {offsets = [0, 0], sizes = [8, 64], strides = [1, 1]} : vector<8x128xf32> to vector<8x64xf32>
    %139 = vector.extract_strided_slice %130 {offsets = [0, 0], sizes = [8, 64], strides = [1, 1]} : vector<8x128xf32> to vector<8x64xf32>
    %140 = arith.mulf %138, %139 : vector<8x64xf32>
    %141 = arith.addf %137, %140 : vector<8x64xf32>
    %142 = vector.extract_strided_slice %135 {offsets = [0, 64], sizes = [8, 64], strides = [1, 1]} : vector<8x128xf32> to vector<8x64xf32>
    %143 = math.tanh %141 : vector<8x64xf32>
    %144 = arith.mulf %142, %143 : vector<8x64xf32>
    %cst_35 = arith.constant dense<0.000000e+00> : vector<8x128xf32>
    %145 = tpu.matmul %118, %1, %cst_35 {dimension_numbers = #tpu.dot_dimension_numbers<[1], [0], [0], [1], [0, 0, 1, 1], [], []>} : vector<8x32xf32>, vector<32x128xf32>, vector<8x128xf32> -> vector<8x128xf32>
    %146 = arith.addf %8, %145 : vector<8x128xf32>
    %147 = arith.negf %146 : vector<8x128xf32>
    %148 = math.exp %147 : vector<8x128xf32>
    %cst_36 = arith.constant 1.000000e+00 : f32
    %149 = vector.broadcast %cst_36 : f32 to vector<8x128xf32>
    %150 = arith.addf %149, %148 : vector<8x128xf32>
    %151 = arith.divf %149, %150 : vector<8x128xf32>
    %152 = math.tanh %146 : vector<8x128xf32>
    %153 = vector.extract_strided_slice %151 {offsets = [0, 32], sizes = [8, 32], strides = [1, 1]} : vector<8x128xf32> to vector<8x32xf32>
    %154 = arith.mulf %153, %115 : vector<8x32xf32>
    %155 = vector.extract_strided_slice %151 {offsets = [0, 0], sizes = [8, 32], strides = [1, 1]} : vector<8x128xf32> to vector<8x32xf32>
    %156 = vector.extract_strided_slice %152 {offsets = [0, 64], sizes = [8, 32], strides = [1, 1]} : vector<8x128xf32> to vector<8x32xf32>
    %157 = arith.mulf %155, %156 : vector<8x32xf32>
    %158 = arith.addf %154, %157 : vector<8x32xf32>
    %159 = vector.extract_strided_slice %151 {offsets = [0, 96], sizes = [8, 32], strides = [1, 1]} : vector<8x128xf32> to vector<8x32xf32>
    %160 = math.tanh %158 : vector<8x32xf32>
    %161 = arith.mulf %159, %160 : vector<8x32xf32>
    %cst_37 = arith.constant dense<0.000000e+00> : vector<8x256xf32>
    %162 = tpu.matmul %161, %2, %cst_37 {dimension_numbers = #tpu.dot_dimension_numbers<[1], [0], [0], [1], [0, 0, 1, 1], [], []>} : vector<8x32xf32>, vector<32x256xf32>, vector<8x256xf32> -> vector<8x256xf32>
    %cst_38 = arith.constant dense<0.000000e+00> : vector<8x256xf32>
    %163 = tpu.matmul %144, %3, %cst_38 {dimension_numbers = #tpu.dot_dimension_numbers<[1], [0], [0], [1], [0, 0, 1, 1], [], []>} : vector<8x64xf32>, vector<64x256xf32>, vector<8x256xf32> -> vector<8x256xf32>
    %164 = arith.addf %162, %163 : vector<8x256xf32>
    %165 = arith.addf %164, %11 : vector<8x256xf32>
    %166 = vector.extract_strided_slice %165 {offsets = [0, 0], sizes = [8, 128], strides = [1, 1]} : vector<8x256xf32> to vector<8x128xf32>
    %167 = arith.negf %166 : vector<8x128xf32>
    %168 = math.exp %167 : vector<8x128xf32>
    %cst_39 = arith.constant 1.000000e+00 : f32
    %169 = vector.broadcast %cst_39 : f32 to vector<8x128xf32>
    %170 = arith.addf %169, %168 : vector<8x128xf32>
    %171 = arith.divf %169, %170 : vector<8x128xf32>
    %172 = vector.extract_strided_slice %165 {offsets = [0, 128], sizes = [8, 128], strides = [1, 1]} : vector<8x256xf32> to vector<8x128xf32>
    %173 = math.tanh %172 : vector<8x128xf32>
    %174 = arith.negf %172 : vector<8x128xf32>
    %175 = math.exp %174 : vector<8x128xf32>
    %cst_40 = arith.constant 1.000000e+00 : f32
    %176 = vector.broadcast %cst_40 : f32 to vector<8x128xf32>
    %177 = arith.addf %176, %175 : vector<8x128xf32>
    %178 = arith.divf %176, %177 : vector<8x128xf32>
    %179 = vector.extract_strided_slice %171 {offsets = [0, 64], sizes = [8, 64], strides = [1, 1]} : vector<8x128xf32> to vector<8x64xf32>
    %180 = arith.mulf %179, %141 : vector<8x64xf32>
    %181 = vector.extract_strided_slice %171 {offsets = [0, 0], sizes = [8, 64], strides = [1, 1]} : vector<8x128xf32> to vector<8x64xf32>
    %182 = vector.extract_strided_slice %173 {offsets = [0, 0], sizes = [8, 64], strides = [1, 1]} : vector<8x128xf32> to vector<8x64xf32>
    %183 = arith.mulf %181, %182 : vector<8x64xf32>
    %184 = arith.addf %180, %183 : vector<8x64xf32>
    %185 = vector.extract_strided_slice %178 {offsets = [0, 64], sizes = [8, 64], strides = [1, 1]} : vector<8x128xf32> to vector<8x64xf32>
    %186 = math.tanh %184 : vector<8x64xf32>
    %187 = arith.mulf %185, %186 : vector<8x64xf32>
    %cst_41 = arith.constant dense<0.000000e+00> : vector<8x128xf32>
    %188 = tpu.matmul %161, %1, %cst_41 {dimension_numbers = #tpu.dot_dimension_numbers<[1], [0], [0], [1], [0, 0, 1, 1], [], []>} : vector<8x32xf32>, vector<32x128xf32>, vector<8x128xf32> -> vector<8x128xf32>
    %189 = arith.addf %8, %188 : vector<8x128xf32>
    %190 = arith.negf %189 : vector<8x128xf32>
    %191 = math.exp %190 : vector<8x128xf32>
    %cst_42 = arith.constant 1.000000e+00 : f32
    %192 = vector.broadcast %cst_42 : f32 to vector<8x128xf32>
    %193 = arith.addf %192, %191 : vector<8x128xf32>
    %194 = arith.divf %192, %193 : vector<8x128xf32>
    %195 = math.tanh %189 : vector<8x128xf32>
    %196 = vector.extract_strided_slice %194 {offsets = [0, 32], sizes = [8, 32], strides = [1, 1]} : vector<8x128xf32> to vector<8x32xf32>
    %197 = arith.mulf %196, %158 : vector<8x32xf32>
    %198 = vector.extract_strided_slice %194 {offsets = [0, 0], sizes = [8, 32], strides = [1, 1]} : vector<8x128xf32> to vector<8x32xf32>
    %199 = vector.extract_strided_slice %195 {offsets = [0, 64], sizes = [8, 32], strides = [1, 1]} : vector<8x128xf32> to vector<8x32xf32>
    %200 = arith.mulf %198, %199 : vector<8x32xf32>
    %201 = arith.addf %197, %200 : vector<8x32xf32>
    %202 = vector.extract_strided_slice %194 {offsets = [0, 96], sizes = [8, 32], strides = [1, 1]} : vector<8x128xf32> to vector<8x32xf32>
    %203 = math.tanh %201 : vector<8x32xf32>
    %204 = arith.mulf %202, %203 : vector<8x32xf32>
    %cst_43 = arith.constant dense<0.000000e+00> : vector<8x256xf32>
    %205 = tpu.matmul %204, %2, %cst_43 {dimension_numbers = #tpu.dot_dimension_numbers<[1], [0], [0], [1], [0, 0, 1, 1], [], []>} : vector<8x32xf32>, vector<32x256xf32>, vector<8x256xf32> -> vector<8x256xf32>
    %cst_44 = arith.constant dense<0.000000e+00> : vector<8x256xf32>
    %206 = tpu.matmul %187, %3, %cst_44 {dimension_numbers = #tpu.dot_dimension_numbers<[1], [0], [0], [1], [0, 0, 1, 1], [], []>} : vector<8x64xf32>, vector<64x256xf32>, vector<8x256xf32> -> vector<8x256xf32>
    %207 = arith.addf %205, %206 : vector<8x256xf32>
    %208 = arith.addf %207, %11 : vector<8x256xf32>
    %209 = vector.extract_strided_slice %208 {offsets = [0, 0], sizes = [8, 128], strides = [1, 1]} : vector<8x256xf32> to vector<8x128xf32>
    %210 = arith.negf %209 : vector<8x128xf32>
    %211 = math.exp %210 : vector<8x128xf32>
    %cst_45 = arith.constant 1.000000e+00 : f32
    %212 = vector.broadcast %cst_45 : f32 to vector<8x128xf32>
    %213 = arith.addf %212, %211 : vector<8x128xf32>
    %214 = arith.divf %212, %213 : vector<8x128xf32>
    %215 = vector.extract_strided_slice %208 {offsets = [0, 128], sizes = [8, 128], strides = [1, 1]} : vector<8x256xf32> to vector<8x128xf32>
    %216 = math.tanh %215 : vector<8x128xf32>
    %217 = arith.negf %215 : vector<8x128xf32>
    %218 = math.exp %217 : vector<8x128xf32>
    %cst_46 = arith.constant 1.000000e+00 : f32
    %219 = vector.broadcast %cst_46 : f32 to vector<8x128xf32>
    %220 = arith.addf %219, %218 : vector<8x128xf32>
    %221 = arith.divf %219, %220 : vector<8x128xf32>
    %222 = vector.extract_strided_slice %214 {offsets = [0, 64], sizes = [8, 64], strides = [1, 1]} : vector<8x128xf32> to vector<8x64xf32>
    %223 = arith.mulf %222, %184 : vector<8x64xf32>
    %224 = vector.extract_strided_slice %214 {offsets = [0, 0], sizes = [8, 64], strides = [1, 1]} : vector<8x128xf32> to vector<8x64xf32>
    %225 = vector.extract_strided_slice %216 {offsets = [0, 0], sizes = [8, 64], strides = [1, 1]} : vector<8x128xf32> to vector<8x64xf32>
    %226 = arith.mulf %224, %225 : vector<8x64xf32>
    %227 = arith.addf %223, %226 : vector<8x64xf32>
    %228 = vector.extract_strided_slice %221 {offsets = [0, 64], sizes = [8, 64], strides = [1, 1]} : vector<8x128xf32> to vector<8x64xf32>
    %229 = math.tanh %227 : vector<8x64xf32>
    %230 = arith.mulf %228, %229 : vector<8x64xf32>
    %cst_47 = arith.constant dense<0.000000e+00> : vector<8x128xf32>
    %231 = tpu.matmul %204, %1, %cst_47 {dimension_numbers = #tpu.dot_dimension_numbers<[1], [0], [0], [1], [0, 0, 1, 1], [], []>} : vector<8x32xf32>, vector<32x128xf32>, vector<8x128xf32> -> vector<8x128xf32>
    %232 = arith.addf %8, %231 : vector<8x128xf32>
    %233 = arith.negf %232 : vector<8x128xf32>
    %234 = math.exp %233 : vector<8x128xf32>
    %cst_48 = arith.constant 1.000000e+00 : f32
    %235 = vector.broadcast %cst_48 : f32 to vector<8x128xf32>
    %236 = arith.addf %235, %234 : vector<8x128xf32>
    %237 = arith.divf %235, %236 : vector<8x128xf32>
    %238 = math.tanh %232 : vector<8x128xf32>
    %239 = vector.extract_strided_slice %237 {offsets = [0, 32], sizes = [8, 32], strides = [1, 1]} : vector<8x128xf32> to vector<8x32xf32>
    %240 = arith.mulf %239, %201 : vector<8x32xf32>
    %241 = vector.extract_strided_slice %237 {offsets = [0, 0], sizes = [8, 32], strides = [1, 1]} : vector<8x128xf32> to vector<8x32xf32>
    %242 = vector.extract_strided_slice %238 {offsets = [0, 64], sizes = [8, 32], strides = [1, 1]} : vector<8x128xf32> to vector<8x32xf32>
    %243 = arith.mulf %241, %242 : vector<8x32xf32>
    %244 = arith.addf %240, %243 : vector<8x32xf32>
    %245 = vector.extract_strided_slice %237 {offsets = [0, 96], sizes = [8, 32], strides = [1, 1]} : vector<8x128xf32> to vector<8x32xf32>
    %246 = math.tanh %244 : vector<8x32xf32>
    %247 = arith.mulf %245, %246 : vector<8x32xf32>
    %cst_49 = arith.constant dense<0.000000e+00> : vector<8x256xf32>
    %248 = tpu.matmul %247, %2, %cst_49 {dimension_numbers = #tpu.dot_dimension_numbers<[1], [0], [0], [1], [0, 0, 1, 1], [], []>} : vector<8x32xf32>, vector<32x256xf32>, vector<8x256xf32> -> vector<8x256xf32>
    %cst_50 = arith.constant dense<0.000000e+00> : vector<8x256xf32>
    %249 = tpu.matmul %230, %3, %cst_50 {dimension_numbers = #tpu.dot_dimension_numbers<[1], [0], [0], [1], [0, 0, 1, 1], [], []>} : vector<8x64xf32>, vector<64x256xf32>, vector<8x256xf32> -> vector<8x256xf32>
    %250 = arith.addf %248, %249 : vector<8x256xf32>
    %251 = arith.addf %250, %11 : vector<8x256xf32>
    %252 = vector.extract_strided_slice %251 {offsets = [0, 0], sizes = [8, 128], strides = [1, 1]} : vector<8x256xf32> to vector<8x128xf32>
    %253 = arith.negf %252 : vector<8x128xf32>
    %254 = math.exp %253 : vector<8x128xf32>
    %cst_51 = arith.constant 1.000000e+00 : f32
    %255 = vector.broadcast %cst_51 : f32 to vector<8x128xf32>
    %256 = arith.addf %255, %254 : vector<8x128xf32>
    %257 = arith.divf %255, %256 : vector<8x128xf32>
    %258 = vector.extract_strided_slice %251 {offsets = [0, 128], sizes = [8, 128], strides = [1, 1]} : vector<8x256xf32> to vector<8x128xf32>
    %259 = math.tanh %258 : vector<8x128xf32>
    %260 = arith.negf %258 : vector<8x128xf32>
    %261 = math.exp %260 : vector<8x128xf32>
    %cst_52 = arith.constant 1.000000e+00 : f32
    %262 = vector.broadcast %cst_52 : f32 to vector<8x128xf32>
    %263 = arith.addf %262, %261 : vector<8x128xf32>
    %264 = arith.divf %262, %263 : vector<8x128xf32>
    %265 = vector.extract_strided_slice %257 {offsets = [0, 64], sizes = [8, 64], strides = [1, 1]} : vector<8x128xf32> to vector<8x64xf32>
    %266 = arith.mulf %265, %227 : vector<8x64xf32>
    %267 = vector.extract_strided_slice %257 {offsets = [0, 0], sizes = [8, 64], strides = [1, 1]} : vector<8x128xf32> to vector<8x64xf32>
    %268 = vector.extract_strided_slice %259 {offsets = [0, 0], sizes = [8, 64], strides = [1, 1]} : vector<8x128xf32> to vector<8x64xf32>
    %269 = arith.mulf %267, %268 : vector<8x64xf32>
    %270 = arith.addf %266, %269 : vector<8x64xf32>
    %271 = vector.extract_strided_slice %264 {offsets = [0, 64], sizes = [8, 64], strides = [1, 1]} : vector<8x128xf32> to vector<8x64xf32>
    %272 = math.tanh %270 : vector<8x64xf32>
    %273 = arith.mulf %271, %272 : vector<8x64xf32>
    %cst_53 = arith.constant dense<0.000000e+00> : vector<8x128xf32>
    %274 = tpu.matmul %247, %1, %cst_53 {dimension_numbers = #tpu.dot_dimension_numbers<[1], [0], [0], [1], [0, 0, 1, 1], [], []>} : vector<8x32xf32>, vector<32x128xf32>, vector<8x128xf32> -> vector<8x128xf32>
    %275 = arith.addf %8, %274 : vector<8x128xf32>
    %276 = arith.negf %275 : vector<8x128xf32>
    %277 = math.exp %276 : vector<8x128xf32>
    %cst_54 = arith.constant 1.000000e+00 : f32
    %278 = vector.broadcast %cst_54 : f32 to vector<8x128xf32>
    %279 = arith.addf %278, %277 : vector<8x128xf32>
    %280 = arith.divf %278, %279 : vector<8x128xf32>
    %281 = math.tanh %275 : vector<8x128xf32>
    %282 = vector.extract_strided_slice %280 {offsets = [0, 32], sizes = [8, 32], strides = [1, 1]} : vector<8x128xf32> to vector<8x32xf32>
    %283 = arith.mulf %282, %244 : vector<8x32xf32>
    %284 = vector.extract_strided_slice %280 {offsets = [0, 0], sizes = [8, 32], strides = [1, 1]} : vector<8x128xf32> to vector<8x32xf32>
    %285 = vector.extract_strided_slice %281 {offsets = [0, 64], sizes = [8, 32], strides = [1, 1]} : vector<8x128xf32> to vector<8x32xf32>
    %286 = arith.mulf %284, %285 : vector<8x32xf32>
    %287 = arith.addf %283, %286 : vector<8x32xf32>
    %288 = vector.extract_strided_slice %280 {offsets = [0, 96], sizes = [8, 32], strides = [1, 1]} : vector<8x128xf32> to vector<8x32xf32>
    %289 = math.tanh %287 : vector<8x32xf32>
    %290 = arith.mulf %288, %289 : vector<8x32xf32>
    %cst_55 = arith.constant dense<0.000000e+00> : vector<8x256xf32>
    %291 = tpu.matmul %290, %2, %cst_55 {dimension_numbers = #tpu.dot_dimension_numbers<[1], [0], [0], [1], [0, 0, 1, 1], [], []>} : vector<8x32xf32>, vector<32x256xf32>, vector<8x256xf32> -> vector<8x256xf32>
    %cst_56 = arith.constant dense<0.000000e+00> : vector<8x256xf32>
    %292 = tpu.matmul %273, %3, %cst_56 {dimension_numbers = #tpu.dot_dimension_numbers<[1], [0], [0], [1], [0, 0, 1, 1], [], []>} : vector<8x64xf32>, vector<64x256xf32>, vector<8x256xf32> -> vector<8x256xf32>
    %293 = arith.addf %291, %292 : vector<8x256xf32>
    %294 = arith.addf %293, %11 : vector<8x256xf32>
    %295 = vector.extract_strided_slice %294 {offsets = [0, 0], sizes = [8, 128], strides = [1, 1]} : vector<8x256xf32> to vector<8x128xf32>
    %296 = arith.negf %295 : vector<8x128xf32>
    %297 = math.exp %296 : vector<8x128xf32>
    %cst_57 = arith.constant 1.000000e+00 : f32
    %298 = vector.broadcast %cst_57 : f32 to vector<8x128xf32>
    %299 = arith.addf %298, %297 : vector<8x128xf32>
    %300 = arith.divf %298, %299 : vector<8x128xf32>
    %301 = vector.extract_strided_slice %294 {offsets = [0, 128], sizes = [8, 128], strides = [1, 1]} : vector<8x256xf32> to vector<8x128xf32>
    %302 = math.tanh %301 : vector<8x128xf32>
    %303 = arith.negf %301 : vector<8x128xf32>
    %304 = math.exp %303 : vector<8x128xf32>
    %cst_58 = arith.constant 1.000000e+00 : f32
    %305 = vector.broadcast %cst_58 : f32 to vector<8x128xf32>
    %306 = arith.addf %305, %304 : vector<8x128xf32>
    %307 = arith.divf %305, %306 : vector<8x128xf32>
    %308 = vector.extract_strided_slice %300 {offsets = [0, 64], sizes = [8, 64], strides = [1, 1]} : vector<8x128xf32> to vector<8x64xf32>
    %309 = arith.mulf %308, %270 : vector<8x64xf32>
    %310 = vector.extract_strided_slice %300 {offsets = [0, 0], sizes = [8, 64], strides = [1, 1]} : vector<8x128xf32> to vector<8x64xf32>
    %311 = vector.extract_strided_slice %302 {offsets = [0, 0], sizes = [8, 64], strides = [1, 1]} : vector<8x128xf32> to vector<8x64xf32>
    %312 = arith.mulf %310, %311 : vector<8x64xf32>
    %313 = arith.addf %309, %312 : vector<8x64xf32>
    %314 = vector.extract_strided_slice %307 {offsets = [0, 64], sizes = [8, 64], strides = [1, 1]} : vector<8x128xf32> to vector<8x64xf32>
    %315 = math.tanh %313 : vector<8x64xf32>
    %316 = arith.mulf %314, %315 : vector<8x64xf32>
    %cst_59 = arith.constant dense<0.000000e+00> : vector<8x128xf32>
    %317 = tpu.matmul %290, %1, %cst_59 {dimension_numbers = #tpu.dot_dimension_numbers<[1], [0], [0], [1], [0, 0, 1, 1], [], []>} : vector<8x32xf32>, vector<32x128xf32>, vector<8x128xf32> -> vector<8x128xf32>
    %318 = arith.addf %8, %317 : vector<8x128xf32>
    %319 = arith.negf %318 : vector<8x128xf32>
    %320 = math.exp %319 : vector<8x128xf32>
    %cst_60 = arith.constant 1.000000e+00 : f32
    %321 = vector.broadcast %cst_60 : f32 to vector<8x128xf32>
    %322 = arith.addf %321, %320 : vector<8x128xf32>
    %323 = arith.divf %321, %322 : vector<8x128xf32>
    %324 = math.tanh %318 : vector<8x128xf32>
    %325 = vector.extract_strided_slice %323 {offsets = [0, 32], sizes = [8, 32], strides = [1, 1]} : vector<8x128xf32> to vector<8x32xf32>
    %326 = arith.mulf %325, %287 : vector<8x32xf32>
    %327 = vector.extract_strided_slice %323 {offsets = [0, 0], sizes = [8, 32], strides = [1, 1]} : vector<8x128xf32> to vector<8x32xf32>
    %328 = vector.extract_strided_slice %324 {offsets = [0, 64], sizes = [8, 32], strides = [1, 1]} : vector<8x128xf32> to vector<8x32xf32>
    %329 = arith.mulf %327, %328 : vector<8x32xf32>
    %330 = arith.addf %326, %329 : vector<8x32xf32>
    %331 = vector.extract_strided_slice %323 {offsets = [0, 96], sizes = [8, 32], strides = [1, 1]} : vector<8x128xf32> to vector<8x32xf32>
    %332 = math.tanh %330 : vector<8x32xf32>
    %333 = arith.mulf %331, %332 : vector<8x32xf32>
    %cst_61 = arith.constant dense<0.000000e+00> : vector<8x256xf32>
    %334 = tpu.matmul %333, %2, %cst_61 {dimension_numbers = #tpu.dot_dimension_numbers<[1], [0], [0], [1], [0, 0, 1, 1], [], []>} : vector<8x32xf32>, vector<32x256xf32>, vector<8x256xf32> -> vector<8x256xf32>
    %cst_62 = arith.constant dense<0.000000e+00> : vector<8x256xf32>
    %335 = tpu.matmul %316, %3, %cst_62 {dimension_numbers = #tpu.dot_dimension_numbers<[1], [0], [0], [1], [0, 0, 1, 1], [], []>} : vector<8x64xf32>, vector<64x256xf32>, vector<8x256xf32> -> vector<8x256xf32>
    %336 = arith.addf %334, %335 : vector<8x256xf32>
    %337 = arith.addf %336, %11 : vector<8x256xf32>
    %338 = vector.extract_strided_slice %337 {offsets = [0, 0], sizes = [8, 128], strides = [1, 1]} : vector<8x256xf32> to vector<8x128xf32>
    %339 = arith.negf %338 : vector<8x128xf32>
    %340 = math.exp %339 : vector<8x128xf32>
    %cst_63 = arith.constant 1.000000e+00 : f32
    %341 = vector.broadcast %cst_63 : f32 to vector<8x128xf32>
    %342 = arith.addf %341, %340 : vector<8x128xf32>
    %343 = arith.divf %341, %342 : vector<8x128xf32>
    %344 = vector.extract_strided_slice %337 {offsets = [0, 128], sizes = [8, 128], strides = [1, 1]} : vector<8x256xf32> to vector<8x128xf32>
    %345 = math.tanh %344 : vector<8x128xf32>
    %346 = arith.negf %344 : vector<8x128xf32>
    %347 = math.exp %346 : vector<8x128xf32>
    %cst_64 = arith.constant 1.000000e+00 : f32
    %348 = vector.broadcast %cst_64 : f32 to vector<8x128xf32>
    %349 = arith.addf %348, %347 : vector<8x128xf32>
    %350 = arith.divf %348, %349 : vector<8x128xf32>
    %351 = vector.extract_strided_slice %343 {offsets = [0, 64], sizes = [8, 64], strides = [1, 1]} : vector<8x128xf32> to vector<8x64xf32>
    %352 = arith.mulf %351, %313 : vector<8x64xf32>
    %353 = vector.extract_strided_slice %343 {offsets = [0, 0], sizes = [8, 64], strides = [1, 1]} : vector<8x128xf32> to vector<8x64xf32>
    %354 = vector.extract_strided_slice %345 {offsets = [0, 0], sizes = [8, 64], strides = [1, 1]} : vector<8x128xf32> to vector<8x64xf32>
    %355 = arith.mulf %353, %354 : vector<8x64xf32>
    %356 = arith.addf %352, %355 : vector<8x64xf32>
    %357 = vector.extract_strided_slice %350 {offsets = [0, 64], sizes = [8, 64], strides = [1, 1]} : vector<8x128xf32> to vector<8x64xf32>
    %358 = math.tanh %356 : vector<8x64xf32>
    %359 = arith.mulf %357, %358 : vector<8x64xf32>
    %360 = tpu.concatenate %58, %101, %144, %187, %230, %273, %316, %359 in 0 : vector<8x64xf32>, vector<8x64xf32>, vector<8x64xf32>, vector<8x64xf32>, vector<8x64xf32>, vector<8x64xf32>, vector<8x64xf32>, vector<8x64xf32> -> vector<64x64xf32>
    %c0_65 = arith.constant 0 : index
    %c0_66 = arith.constant 0 : index
    %361 = vector.load %arg8[%c0_65, %c0_66] : memref<64x1xf32, #tpu.memory_space<vmem>>, vector<64x1xf32>
    %cst_67 = arith.constant dense<0.000000e+00> : vector<64x1xf32>
    %362 = tpu.matmul %360, %361, %cst_67 {dimension_numbers = #tpu.dot_dimension_numbers<[1], [0], [0], [1], [0, 0, 1, 1], [], []>} : vector<64x64xf32>, vector<64x1xf32>, vector<64x1xf32> -> vector<64x1xf32>
    %c0_68 = arith.constant 0 : index
    %c0_69 = arith.constant 0 : index
    %363 = vector.load %arg9[%c0_68, %c0_69] : memref<1x1xf32, #tpu.memory_space<vmem>>, vector<1x1xf32>
    %364 = vector.broadcast %363 : vector<1x1xf32> to vector<64x1xf32>
    %365 = arith.addf %362, %364 : vector<64x1xf32>
    %c0_70 = arith.constant 0 : index
    %c0_71 = arith.constant 0 : index
    %366 = vector.load %arg10[%c0_70, %c0_71] : memref<64x1xf32, #tpu.memory_space<vmem>>, vector<64x1xf32>
    tpu.vector_store %arg10[%c0_70, %c0_71], %365 {strides = array<i32>} : memref<64x1xf32, #tpu.memory_space<vmem>>, vector<64x1xf32>,
    return
  }
  func.func @transform_0(%arg0: i32) -> (i32, i32) {
    %c0_i32 = arith.constant 0 : i32
    %c0_i32_0 = arith.constant 0 : i32
    %c0_i32_1 = arith.constant 0 : i32
    return %c0_i32, %c0_i32_0 : i32, i32
  }
  func.func @transform_1(%arg0: i32) -> (i32, i32) {
    %c0_i32 = arith.constant 0 : i32
    %c0_i32_0 = arith.constant 0 : i32
    %c0_i32_1 = arith.constant 0 : i32
    return %c0_i32, %c0_i32_0 : i32, i32
  }
  func.func @transform_2(%arg0: i32) -> (i32, i32) {
    %c0_i32 = arith.constant 0 : i32
    %c0_i32_0 = arith.constant 0 : i32
    %c0_i32_1 = arith.constant 0 : i32
    return %c0_i32, %c0_i32_0 : i32, i32
  }
  func.func @transform_3(%arg0: i32) -> (i32, i32) {
    %c0_i32 = arith.constant 0 : i32
    %c0_i32_0 = arith.constant 0 : i32
    %c0_i32_1 = arith.constant 0 : i32
    return %c0_i32, %c0_i32_0 : i32, i32
  }
  func.func @transform_4(%arg0: i32) -> (i32, i32) {
    %c0_i32 = arith.constant 0 : i32
    %c0_i32_0 = arith.constant 0 : i32
    %c0_i32_1 = arith.constant 0 : i32
    return %c0_i32, %c0_i32_0 : i32, i32
  }
  func.func @transform_5(%arg0: i32) -> (i32, i32) {
    %c0_i32 = arith.constant 0 : i32
    %c0_i32_0 = arith.constant 0 : i32
    %c0_i32_1 = arith.constant 0 : i32
    return %c0_i32, %c0_i32_0 : i32, i32
  }
  func.func @transform_6(%arg0: i32) -> (i32, i32) {
    %c0_i32 = arith.constant 0 : i32
    %c0_i32_0 = arith.constant 0 : i32
    %c0_i32_1 = arith.constant 0 : i32
    return %c0_i32, %c0_i32_0 : i32, i32
  }
  func.func @transform_7(%arg0: i32) -> (i32, i32) {
    %c0_i32 = arith.constant 0 : i32
    %c0_i32_0 = arith.constant 0 : i32
    %c0_i32_1 = arith.constant 0 : i32
    return %c0_i32, %c0_i32_0 : i32, i32
  }
  func.func @transform_8(%arg0: i32) -> (i32, i32) {
    %c0_i32 = arith.constant 0 : i32
    %c0_i32_0 = arith.constant 0 : i32
    %c0_i32_1 = arith.constant 0 : i32
    return %c0_i32, %c0_i32_0 : i32, i32
  }
  func.func @transform_9(%arg0: i32) -> (i32, i32) {
    %c0_i32 = arith.constant 0 : i32
    %c0_i32_0 = arith.constant 0 : i32
    %c0_i32_1 = arith.constant 0 : i32
    return %c0_i32, %c0_i32_0 : i32, i32
  }
}

</mosaic_0001>

<llo_original>
// kernel: tpu_custom_call.1
$region0: #{tpu_custom_call.1}
  #allocation0 [shape = 'u32[]', space=smem, size = 0x4, offset = 0x4, fixed_abs, tag = 'smem constant byte address 0x4 - core index']
  #allocation1 [shape = 'u32[72,128]{1,0:T(1,128)}', space=vmem, size = 0x9000, scoped, tag = 'internal scratch']
  #allocation2 [shape = 'f32[1,1]{1,0:T(1,128)S(1)}', space=vmem, size = 0x200, scoped, tag = 'scoped memory for tpu_custom_call.1']
  %s0 = inlined_call_operand.hbm [shape: f32[8,32], index: 0, kind: input, shape index: {}]
  %s1 = inlined_call_operand.hbm [shape: f32[32,128], index: 1, kind: input, shape index: {}]
  %s2 = inlined_call_operand.hbm [shape: f32[32,128], index: 2, kind: input, shape index: {}]
  %s3 = inlined_call_operand.vmem [shape: f32[1,128], index: 3, kind: input, shape index: {}]
  %s4 = inlined_call_operand.vmem [shape: f32[32,256], index: 4, kind: input, shape index: {}]
  %s5 = inlined_call_operand.hbm [shape: f32[64,256], index: 5, kind: input, shape index: {}]
  %s6 = inlined_call_operand.vmem [shape: f32[1,256], index: 6, kind: input, shape index: {}]
  %s7 = inlined_call_operand.vmem [shape: f32[64,1], index: 7, kind: input, shape index: {}]
  %s8 = inlined_call_operand.<no memory space> [shape: f32[1,1], index: 8, kind: input, shape index: {}]
  %s9 = inlined_call_operand.vmem [shape: f32[64,1], index: 9, kind: output, shape index: {}]
  %s10 = sld [smem:[#allocation0]]
  $region62: #{tpu_custom_call.1} parent=0
    _
  %s12 = ssub.s32 1, %s10
  %s13 = scalar_select 0, %s12, %s10
  %v14 = vstv %s8
  %15 = vst [vmem:[#allocation2] sm:$0x1] %v14
  $region1: #{tpu_custom_call.1} parent=0
    #allocation3 [shape = 'u8[4096]{0}', space=vmem, size = 0x1000, scoped, tag = 'input window, operand 0, single buffered']
    #allocation4 [shape = 's32[1]{0}', space=sflag, size = 0x4, scoped, tag = 'scoped memory for tpu_custom_call.1']
    #allocation5 [shape = 'u8[16384]{0}', space=vmem, size = 0x4000, scoped, tag = 'input window, operand 1, single buffered']
    #allocation6 [shape = 's32[1]{0}', space=sflag, size = 0x4, scoped, tag = 'scoped memory for tpu_custom_call.1']
    #allocation7 [shape = 'u8[16384]{0}', space=vmem, size = 0x4000, scoped, tag = 'input window, operand 2, single buffered']
    #allocation8 [shape = 'u8[65536]{0}', space=vmem, size = 0x10000, scoped, tag = 'input window, operand 5, single buffered']
    #allocation9 [shape = 's32[1]{0}', space=sflag, size = 0x4, scoped, tag = 'scoped memory for tpu_custom_call.1']
    %16 = vsyncpa [#allocation4], 0
    %17 = vsyncpa [#allocation6], 0
    %18 = vsyncpa [#allocation9], 0
    // Predicated region
    $region2: #{tpu_custom_call.1} parent=1 // pred_check
      _
    $region3: #{tpu_custom_call.1} parent=1 // pred_check_branch
      %20 = sbr.rel (0) target = $region5
    $region4: #{tpu_custom_call.1} parent=1 // pred_region
      %22 = vsyncadd [#allocation4], 0
      %s24 = sshll.u32 %s0, 4
      %s25 = int_to_ptr.hbm [resolvable:$true] %s24
      %s26 = sshll.u32 [#allocation3], 4
      %s27 = int_to_ptr.vmem [resolvable:$true] %s26
      %29 = dma.hbm_to_vmem [thread:$0]  %s25, 128, %s27, [#allocation4]
    $region5: #{tpu_custom_call.1} parent=1 // pred_fallthru
      _
    // Predicated region
    $region6: #{tpu_custom_call.1} parent=1 // pred_check
      _
    $region7: #{tpu_custom_call.1} parent=1 // pred_check_branch
      %31 = sbr.rel (0) target = $region9
    $region8: #{tpu_custom_call.1} parent=1 // pred_region
      %33 = vsyncadd [#allocation6], 0
      %s34 = sshll.u32 %s1, 4
      %s35 = int_to_ptr.hbm [resolvable:$true] %s34
      %s36 = sshll.u32 [#allocation5], 4
      %s37 = int_to_ptr.vmem [resolvable:$true] %s36
      %42 = dma.hbm_to_vmem [thread:$0]  %s35, 512, %s37, [#allocation6], 128, 128, 8
    $region9: #{tpu_custom_call.1} parent=1 // pred_fallthru
      _
    // Predicated region
    $region10: #{tpu_custom_call.1} parent=1 // pred_check
      _
    $region11: #{tpu_custom_call.1} parent=1 // pred_check_branch
      %44 = sbr.rel (0) target = $region13
    $region12: #{tpu_custom_call.1} parent=1 // pred_region
      %46 = vsyncadd [#allocation6], 0
      %s47 = sshll.u32 %s2, 4
      %s48 = int_to_ptr.hbm [resolvable:$true] %s47
      %s49 = sshll.u32 [#allocation7], 4
      %s50 = int_to_ptr.vmem [resolvable:$true] %s49
      %55 = dma.hbm_to_vmem [thread:$0]  %s48, 512, %s50, [#allocation6], 128, 128, 8
    $region13: #{tpu_custom_call.1} parent=1 // pred_fallthru
      _
    // Predicated region
    $region14: #{tpu_custom_call.1} parent=1 // pred_check
      _
    $region15: #{tpu_custom_call.1} parent=1 // pred_check_branch
      %57 = sbr.rel (0) target = $region17
    $region16: #{tpu_custom_call.1} parent=1 // pred_region
      _
    $region17: #{tpu_custom_call.1} parent=1 // pred_fallthru
      _
    // Predicated region
    $region18: #{tpu_custom_call.1} parent=1 // pred_check
      _
    $region19: #{tpu_custom_call.1} parent=1 // pred_check_branch
      %59 = sbr.rel (0) target = $region21
    $region20: #{tpu_custom_call.1} parent=1 // pred_region
      _
    $region21: #{tpu_custom_call.1} parent=1 // pred_fallthru
      _
    // Predicated region
    $region22: #{tpu_custom_call.1} parent=1 // pred_check
      _
    $region23: #{tpu_custom_call.1} parent=1 // pred_check_branch
      %61 = sbr.rel (0) target = $region25
    $region24: #{tpu_custom_call.1} parent=1 // pred_region
      %63 = vsyncadd [#allocation9], 0
      %s64 = sshll.u32 %s5, 4
      %s65 = int_to_ptr.hbm [resolvable:$true] %s64
      %s66 = sshll.u32 [#allocation8], 4
      %s67 = int_to_ptr.vmem [resolvable:$true] %s66
      %72 = dma.hbm_to_vmem [thread:$0]  %s65, 2048, %s67, [#allocation9], 256, 256, 16
    $region25: #{tpu_custom_call.1} parent=1 // pred_fallthru
      _
    // Predicated region
    $region26: #{tpu_custom_call.1} parent=1 // pred_check
      _
    $region27: #{tpu_custom_call.1} parent=1 // pred_check_branch
      %74 = sbr.rel (0) target = $region29
    $region28: #{tpu_custom_call.1} parent=1 // pred_region
      _
    $region29: #{tpu_custom_call.1} parent=1 // pred_fallthru
      _
    // Predicated region
    $region30: #{tpu_custom_call.1} parent=1 // pred_check
      _
    $region31: #{tpu_custom_call.1} parent=1 // pred_check_branch
      %76 = sbr.rel (0) target = $region33
    $region32: #{tpu_custom_call.1} parent=1 // pred_region
      _
    $region33: #{tpu_custom_call.1} parent=1 // pred_fallthru
      _
    // Predicated region
    $region34: #{tpu_custom_call.1} parent=1 // pred_check
      _
    $region35: #{tpu_custom_call.1} parent=1 // pred_check_branch
      %78 = sbr.rel (0) target = $region37
    $region36: #{tpu_custom_call.1} parent=1 // pred_region
      _
    $region37: #{tpu_custom_call.1} parent=1 // pred_fallthru
      _
    // Predicated region
    $region38: #{tpu_custom_call.1} parent=1 // pred_check
      _
    $region39: #{tpu_custom_call.1} parent=1 // pred_check_branch
      %80 = sbr.rel (0) target = $region41
    $region40: #{tpu_custom_call.1} parent=1 // pred_region
      %82 = dma.done [#allocation4], 128
    $region41: #{tpu_custom_call.1} parent=1 // pred_fallthru
      _
    // Predicated region
    $region42: #{tpu_custom_call.1} parent=1 // pred_check
      _
    $region43: #{tpu_custom_call.1} parent=1 // pred_check_branch
      %84 = sbr.rel (0) target = $region45
    $region44: #{tpu_custom_call.1} parent=1 // pred_region
      %86 = dma.done [#allocation6], 512
    $region45: #{tpu_custom_call.1} parent=1 // pred_fallthru
      _
    // Predicated region
    $region46: #{tpu_custom_call.1} parent=1 // pred_check
      _
    $region47: #{tpu_custom_call.1} parent=1 // pred_check_branch
      %88 = sbr.rel (0) target = $region49
    $region48: #{tpu_custom_call.1} parent=1 // pred_region
      %90 = dma.done [#allocation6], 512
    $region49: #{tpu_custom_call.1} parent=1 // pred_fallthru
      _
    // Predicated region
    $region50: #{tpu_custom_call.1} parent=1 // pred_check
      _
    $region51: #{tpu_custom_call.1} parent=1 // pred_check_branch
      %92 = sbr.rel (0) target = $region53
    $region52: #{tpu_custom_call.1} parent=1 // pred_region
      %94 = dma.done [#allocation9], 2048
    $region53: #{tpu_custom_call.1} parent=1 // pred_fallthru
      _
    %v95 = vld [vmem:[#allocation3] sm:$0xff]
    %v96 = vld [vmem:[#allocation7] sm:$0xff]
    %v97 = vld [vmem:[#allocation7 + $0x8] sm:$0xff]
    %v98 = vld [vmem:[#allocation7 + $0x10] sm:$0xff]
    %v99 = vld [vmem:[#allocation7 + $0x18] sm:$0xff]
    %v100 = vld [vmem:[%s4] sm:$0xff]
    %v101 = vld [vmem:[%s4 + $0x8] sm:$0xff]
    %v102 = vld [vmem:[%s4 + $0x10] sm:$0xff]
    %v103 = vld [vmem:[%s4 + $0x18] sm:$0xff]
    %v104 = vld [vmem:[%s4 + $0x20] sm:$0xff]
    %v105 = vld [vmem:[%s4 + $0x28] sm:$0xff]
    %v106 = vld [vmem:[%s4 + $0x30] sm:$0xff]
    %v107 = vld [vmem:[%s4 + $0x38] sm:$0xff]
    %v108 = vld [vmem:[#allocation8] sm:$0xff]
    %v109 = vld [vmem:[#allocation8 + $0x8] sm:$0xff]
    %v110 = vld [vmem:[#allocation8 + $0x10] sm:$0xff]
    %v111 = vld [vmem:[#allocation8 + $0x18] sm:$0xff]
    %v112 = vld [vmem:[#allocation8 + $0x20] sm:$0xff]
    %v113 = vld [vmem:[#allocation8 + $0x28] sm:$0xff]
    %v114 = vld [vmem:[#allocation8 + $0x30] sm:$0xff]
    %v115 = vld [vmem:[#allocation8 + $0x38] sm:$0xff]
    %v116 = vld [vmem:[#allocation8 + $0x40] sm:$0xff]
    %v117 = vld [vmem:[#allocation8 + $0x48] sm:$0xff]
    %v118 = vld [vmem:[#allocation8 + $0x50] sm:$0xff]
    %v119 = vld [vmem:[#allocation8 + $0x58] sm:$0xff]
    %v120 = vld [vmem:[#allocation8 + $0x60] sm:$0xff]
    %v121 = vld [vmem:[#allocation8 + $0x68] sm:$0xff]
    %v122 = vld [vmem:[#allocation8 + $0x70] sm:$0xff]
    %v123 = vld [vmem:[#allocation8 + $0x78] sm:$0xff]
    %v124 = vld [vmem:[#allocation5] sm:$0xff]
    %v125 = vld [vmem:[#allocation5 + $0x8] sm:$0xff]
    %v126 = vld [vmem:[#allocation5 + $0x10] sm:$0xff]
    %v127 = vld [vmem:[#allocation5 + $0x18] sm:$0xff]
    %v128 = vld [vmem:[%s3] sm:$0x1]
    %v130 = vperm.slane %v128, 0
    %vm132 = vcmask 261120
    %v134 = vsel %vm132, %v95, 0
    %136 = vmatpush.msra.mxu0 0.0
    %137 = vmatpush.msra.mxu0 0.0
    %138 = vmatpush.msra.mxu0 0.0
    %139 = vmatpush.msra.mxu0 0.0
    %140 = vmatpush.msra.mxu0 0.0
    %141 = vmatpush.msra.mxu0 0.0
    %142 = vmatpush.msra.mxu0 0.0
    %143 = vmatpush.msra.mxu0 0.0
    %144 = vmatpush.msra.mxu0 0.0
    %145 = vmatpush.msra.mxu0 0.0
    %146 = vmatpush.msra.mxu0 0.0
    %147 = vmatpush.msra.mxu0 0.0
    %148 = vmatpush.msra.mxu0 %v127
    %149 = vmatpush.msra.mxu0 %v126
    %150 = vmatpush.msra.mxu0 %v125
    %151 = vmatpush.msra.mxu0 %v124
    %152 = vmatmul.f32.gmra.mxu0 %v134
    %v153 = vpop.f32.mrf.mxu0
    %v154 = vadd.f32 %v130, %v153
    %155 = vdwg.mxu0
    %v156 = vld [vmem:[%s6] sm:$0x3]
    %v158 = vperm.slane %v156, 0
    %v159 = vperm.slane %v156, 1
    %v163 = vsel %vm132, 0.0, 0
    %165 = vmatpush.msra.mxu0 0.0
    %166 = vmatpush.msra.mxu0 0.0
    %167 = vmatpush.msra.mxu0 0.0
    %168 = vmatpush.msra.mxu0 0.0
    %169 = vmatpush.msra.mxu0 0.0
    %170 = vmatpush.msra.mxu0 0.0
    %171 = vmatpush.msra.mxu0 0.0
    %172 = vmatpush.msra.mxu0 0.0
    %173 = vmatpush.msra.mxu0 0.0
    %174 = vmatpush.msra.mxu0 0.0
    %175 = vmatpush.msra.mxu0 0.0
    %176 = vmatpush.msra.mxu0 0.0
    %177 = vmatpush.msra.mxu0 %v99
    %178 = vmatpush.msra.mxu0 %v98
    %179 = vmatpush.msra.mxu0 %v97
    %180 = vmatpush.msra.mxu0 %v96
    %181 = vmatmul.f32.gmra.mxu0 %v163
    %v182 = vpop.f32.mrf.mxu0
    %v183 = vadd.f32 0.0, %v182
    %184 = vdwg.mxu0
    %v185 = vadd.f32 %v154, %v183
    %v186 = vxor.u32 %v185, 2147483648
    %v187 = vmul.f32 %v186, 1.442695
    %v188 = vpow.pop %v187
    %v189 = vadd.f32 %v188, 1.0
    %v190 = vrcp.pop %v189
    %v191 = vmul.f32 %v189, %v190
    %v192 = vsub.f32 1.0, %v191
    %v193 = vmul.f32 %v190, %v192
    %v194 = vadd.f32 %v190, %v193
    %vm195 = vweird.f32 %v189
    %vm196 = vweird.f32 %v190
    %vm197 = vmor %vm195, %vm196
    %v198 = vsel %vm197, %v190, %v194
    %v199 = vand.u32 2147483647, %v189
    %vm200 = vcmp.eq.f32.partialorder %v199, 8.507059e+37
    %v201 = vand.u32 %v189, 2147483648
    %v202 = vor.u32 1.1754944e-38, %v201
    %v203 = vsel %vm200, %v202, %v198
    %v204 = vmul.f32 1.0, %v203
    %v205 = vtanh.pop %v185
    %v206 = vmul.f32 %v204, 0.0
    %208 = vrot.lane.b32.xlu0 %v205, 64
    %v209 = vpop.permute.xlu0 %208
    %v211 = vmul.f32 %v204, %v209
    %213 = vrot.lane.b32.xlu0 %v211, 32
    %v214 = vpop.permute.xlu0 %213
    %v216 = vadd.f32 %v206, %v214
    %v217 = vtanh.pop %v216
    %219 = vrot.lane.b32.xlu0 %v217, 64
    %v220 = vpop.permute.xlu0 %219
    %v222 = vmul.f32 %v204, %v220
    %vm223 = vcmask 523264
    %v224 = vsel %vm223, 0.0, 0
    %226 = vmatpush.msra.mxu0 0.0
    %227 = vmatpush.msra.mxu0 0.0
    %228 = vmatpush.msra.mxu0 0.0
    %229 = vmatpush.msra.mxu0 0.0
    %230 = vmatpush.msra.mxu0 0.0
    %231 = vmatpush.msra.mxu0 0.0
    %232 = vmatpush.msra.mxu0 0.0
    %233 = vmatpush.msra.mxu0 0.0
    %234 = vmatpush.msra.mxu0 %v122
    %235 = vmatpush.msra.mxu0 %v120
    %236 = vmatpush.msra.mxu0 %v118
    %237 = vmatpush.msra.mxu0 %v116
    %238 = vmatpush.msra.mxu0 %v114
    %239 = vmatpush.msra.mxu0 %v112
    %240 = vmatpush.msra.mxu0 %v110
    %241 = vmatpush.msra.mxu0 %v108
    %242 = vmatmul.f32.gmra.mxu0 %v224
    %v243 = vpop.f32.mrf.mxu0
    %v244 = vadd.f32 0.0, %v243
    %245 = vdwg.mxu0
    %246 = vmatpush.msra.mxu0 0.0
    %247 = vmatpush.msra.mxu0 0.0
    %248 = vmatpush.msra.mxu0 0.0
    %249 = vmatpush.msra.mxu0 0.0
    %250 = vmatpush.msra.mxu0 0.0
    %251 = vmatpush.msra.mxu0 0.0
    %252 = vmatpush.msra.mxu0 0.0
    %253 = vmatpush.msra.mxu0 0.0
    %254 = vmatpush.msra.mxu0 %v123
    %255 = vmatpush.msra.mxu0 %v121
    %256 = vmatpush.msra.mxu0 %v119
    %257 = vmatpush.msra.mxu0 %v117
    %258 = vmatpush.msra.mxu0 %v115
    %259 = vmatpush.msra.mxu0 %v113
    %260 = vmatpush.msra.mxu0 %v111
    %261 = vmatpush.msra.mxu0 %v109
    %262 = vmatmul.f32.gmra.mxu0 %v224
    %v263 = vpop.f32.mrf.mxu0
    %v264 = vadd.f32 0.0, %v263
    %265 = vdwg.mxu0
    %267 = vrot.lane.b32.xlu0 %v222, 32
    %v268 = vpop.permute.xlu0 %267
    %v269 = vsel %vm132, %v268, 0
    %271 = vmatpush.msra.mxu0 0.0
    %272 = vmatpush.msra.mxu0 0.0
    %273 = vmatpush.msra.mxu0 0.0
    %274 = vmatpush.msra.mxu0 0.0
    %275 = vmatpush.msra.mxu0 0.0
    %276 = vmatpush.msra.mxu0 0.0
    %277 = vmatpush.msra.mxu0 0.0
    %278 = vmatpush.msra.mxu0 0.0
    %279 = vmatpush.msra.mxu0 0.0
    %280 = vmatpush.msra.mxu0 0.0
    %281 = vmatpush.msra.mxu0 0.0
    %282 = vmatpush.msra.mxu0 0.0
    %283 = vmatpush.msra.mxu0 %v106
    %284 = vmatpush.msra.mxu0 %v104
    %285 = vmatpush.msra.mxu0 %v102
    %286 = vmatpush.msra.mxu0 %v100
    %287 = vmatmul.f32.gmra.mxu0 %v269
    %v288 = vpop.f32.mrf.mxu0
    %v289 = vadd.f32 %v244, %v288
    %290 = vdwg.mxu0
    %291 = vmatpush.msra.mxu0 0.0
    %292 = vmatpush.msra.mxu0 0.0
    %293 = vmatpush.msra.mxu0 0.0
    %294 = vmatpush.msra.mxu0 0.0
    %295 = vmatpush.msra.mxu0 0.0
    %296 = vmatpush.msra.mxu0 0.0
    %297 = vmatpush.msra.mxu0 0.0
    %298 = vmatpush.msra.mxu0 0.0
    %299 = vmatpush.msra.mxu0 0.0
    %300 = vmatpush.msra.mxu0 0.0
    %301 = vmatpush.msra.mxu0 0.0
    %302 = vmatpush.msra.mxu0 0.0
    %303 = vmatpush.msra.mxu0 %v107
    %304 = vmatpush.msra.mxu0 %v105
    %305 = vmatpush.msra.mxu0 %v103
    %306 = vmatpush.msra.mxu0 %v101
    %307 = vmatmul.f32.gmra.mxu0 %v269
    %v308 = vpop.f32.mrf.mxu0
    %v309 = vadd.f32 %v264, %v308
    %310 = vdwg.mxu0
    %v311 = vadd.f32 %v289, %v158
    %v312 = vadd.f32 %v309, %v159
    %v313 = vxor.u32 %v311, 2147483648
    %v314 = vmul.f32 %v313, 1.442695
    %v315 = vpow.pop %v314
    %v316 = vadd.f32 %v315, 1.0
    %v317 = vrcp.pop %v316
    %v318 = vmul.f32 %v316, %v317
    %v319 = vsub.f32 1.0, %v318
    %v320 = vmul.f32 %v317, %v319
    %v321 = vadd.f32 %v317, %v320
    %vm322 = vweird.f32 %v316
    %vm323 = vweird.f32 %v317
    %vm324 = vmor %vm322, %vm323
    %v325 = vsel %vm324, %v317, %v321
    %v326 = vand.u32 2147483647, %v316
    %vm327 = vcmp.eq.f32.partialorder %v326, 8.507059e+37
    %v328 = vand.u32 %v316, 2147483648
    %v329 = vor.u32 1.1754944e-38, %v328
    %v330 = vsel %vm327, %v329, %v325
    %v331 = vmul.f32 1.0, %v330
    %v332 = vtanh.pop %v312
    %v333 = vxor.u32 %v312, 2147483648
    %v334 = vmul.f32 %v333, 1.442695
    %v335 = vpow.pop %v334
    %v336 = vadd.f32 %v335, 1.0
    %v337 = vrcp.pop %v336
    %v338 = vmul.f32 %v336, %v337
    %v339 = vsub.f32 1.0, %v338
    %v340 = vmul.f32 %v337, %v339
    %v341 = vadd.f32 %v337, %v340
    %vm342 = vweird.f32 %v336
    %vm343 = vweird.f32 %v337
    %vm344 = vmor %vm342, %vm343
    %v345 = vsel %vm344, %v337, %v341
    %v346 = vand.u32 2147483647, %v336
    %vm347 = vcmp.eq.f32.partialorder %v346, 8.507059e+37
    %v348 = vand.u32 %v336, 2147483648
    %v349 = vor.u32 1.1754944e-38, %v348
    %v350 = vsel %vm347, %v349, %v345
    %v351 = vmul.f32 1.0, %v350
    %v352 = vmul.f32 %v331, 0.0
    %v353 = vmul.f32 %v331, %v332
    %355 = vrot.lane.b32.xlu0 %v353, 64
    %v356 = vpop.permute.xlu0 %355
    %v358 = vadd.f32 %v352, %v356
    %v359 = vtanh.pop %v358
    %v360 = vmul.f32 %v351, %v359
    %361 = vmatpush.msra.mxu0 0.0
    %362 = vmatpush.msra.mxu0 0.0
    %363 = vmatpush.msra.mxu0 0.0
    %364 = vmatpush.msra.mxu0 0.0
    %365 = vmatpush.msra.mxu0 0.0
    %366 = vmatpush.msra.mxu0 0.0
    %367 = vmatpush.msra.mxu0 0.0
    %368 = vmatpush.msra.mxu0 0.0
    %369 = vmatpush.msra.mxu0 0.0
    %370 = vmatpush.msra.mxu0 0.0
    %371 = vmatpush.msra.mxu0 0.0
    %372 = vmatpush.msra.mxu0 0.0
    %373 = vmatpush.msra.mxu0 %v99
    %374 = vmatpush.msra.mxu0 %v98
    %375 = vmatpush.msra.mxu0 %v97
    %376 = vmatpush.msra.mxu0 %v96
    %377 = vmatmul.f32.gmra.mxu0 %v269
    %v378 = vpop.f32.mrf.mxu0
    %v379 = vadd.f32 0.0, %v378
    %380 = vdwg.mxu0
    %v381 = vadd.f32 %v154, %v379
    %v382 = vxor.u32 %v381, 2147483648
    %v383 = vmul.f32 %v382, 1.442695
    %v384 = vpow.pop %v383
    %v385 = vadd.f32 %v384, 1.0
    %v386 = vrcp.pop %v385
    %v387 = vmul.f32 %v385, %v386
    %v388 = vsub.f32 1.0, %v387
    %v389 = vmul.f32 %v386, %v388
    %v390 = vadd.f32 %v386, %v389
    %vm391 = vweird.f32 %v385
    %vm392 = vweird.f32 %v386
    %vm393 = vmor %vm391, %vm392
    %v394 = vsel %vm393, %v386, %v390
    %v395 = vand.u32 2147483647, %v385
    %vm396 = vcmp.eq.f32.partialorder %v395, 8.507059e+37
    %v397 = vand.u32 %v385, 2147483648
    %v398 = vor.u32 1.1754944e-38, %v397
    %v399 = vsel %vm396, %v398, %v394
    %v400 = vmul.f32 1.0, %v399
    %v401 = vtanh.pop %v381
    %v402 = vmul.f32 %v400, %v216
    %404 = vrot.lane.b32.xlu0 %v401, 64
    %v405 = vpop.permute.xlu0 %404
    %v407 = vmul.f32 %v400, %v405
    %409 = vrot.lane.b32.xlu0 %v407, 32
    %v410 = vpop.permute.xlu0 %409
    %v412 = vadd.f32 %v402, %v410
    %v413 = vtanh.pop %v412
    %415 = vrot.lane.b32.xlu0 %v413, 64
    %v416 = vpop.permute.xlu0 %415
    %v418 = vmul.f32 %v400, %v416
    %420 = vrot.lane.b32.xlu0 %v360, 64
    %v421 = vpop.permute.xlu0 %420
    %v422 = vsel %vm223, %v421, 0
    %424 = vmatpush.msra.mxu0 0.0
    %425 = vmatpush.msra.mxu0 0.0
    %426 = vmatpush.msra.mxu0 0.0
    %427 = vmatpush.msra.mxu0 0.0
    %428 = vmatpush.msra.mxu0 0.0
    %429 = vmatpush.msra.mxu0 0.0
    %430 = vmatpush.msra.mxu0 0.0
    %431 = vmatpush.msra.mxu0 0.0
    %432 = vmatpush.msra.mxu0 %v122
    %433 = vmatpush.msra.mxu0 %v120
    %434 = vmatpush.msra.mxu0 %v118
    %435 = vmatpush.msra.mxu0 %v116
    %436 = vmatpush.msra.mxu0 %v114
    %437 = vmatpush.msra.mxu0 %v112
    %438 = vmatpush.msra.mxu0 %v110
    %439 = vmatpush.msra.mxu0 %v108
    %440 = vmatmul.f32.gmra.mxu0 %v422
    %v441 = vpop.f32.mrf.mxu0
    %v442 = vadd.f32 0.0, %v441
    %443 = vdwg.mxu0
    %444 = vmatpush.msra.mxu0 0.0
    %445 = vmatpush.msra.mxu0 0.0
    %446 = vmatpush.msra.mxu0 0.0
    %447 = vmatpush.msra.mxu0 0.0
    %448 = vmatpush.msra.mxu0 0.0
    %449 = vmatpush.msra.mxu0 0.0
    %450 = vmatpush.msra.mxu0 0.0
    %451 = vmatpush.msra.mxu0 0.0
    %452 = vmatpush.msra.mxu0 %v123
    %453 = vmatpush.msra.mxu0 %v121
    %454 = vmatpush.msra.mxu0 %v119
    %455 = vmatpush.msra.mxu0 %v117
    %456 = vmatpush.msra.mxu0 %v115
    %457 = vmatpush.msra.mxu0 %v113
    %458 = vmatpush.msra.mxu0 %v111
    %459 = vmatpush.msra.mxu0 %v109
    %460 = vmatmul.f32.gmra.mxu0 %v422
    %v461 = vpop.f32.mrf.mxu0
    %v462 = vadd.f32 0.0, %v461
    %463 = vdwg.mxu0
    %465 = vrot.lane.b32.xlu0 %v418, 32
    %v466 = vpop.permute.xlu0 %465
    %v467 = vsel %vm132, %v466, 0
    %469 = vmatpush.msra.mxu0 0.0
    %470 = vmatpush.msra.mxu0 0.0
    %471 = vmatpush.msra.mxu0 0.0
    %472 = vmatpush.msra.mxu0 0.0
    %473 = vmatpush.msra.mxu0 0.0
    %474 = vmatpush.msra.mxu0 0.0
    %475 = vmatpush.msra.mxu0 0.0
    %476 = vmatpush.msra.mxu0 0.0
    %477 = vmatpush.msra.mxu0 0.0
    %478 = vmatpush.msra.mxu0 0.0
    %479 = vmatpush.msra.mxu0 0.0
    %480 = vmatpush.msra.mxu0 0.0
    %481 = vmatpush.msra.mxu0 %v106
    %482 = vmatpush.msra.mxu0 %v104
    %483 = vmatpush.msra.mxu0 %v102
    %484 = vmatpush.msra.mxu0 %v100
    %485 = vmatmul.f32.gmra.mxu0 %v467
    %v486 = vpop.f32.mrf.mxu0
    %v487 = vadd.f32 %v442, %v486
    %488 = vdwg.mxu0
    %489 = vmatpush.msra.mxu0 0.0
    %490 = vmatpush.msra.mxu0 0.0
    %491 = vmatpush.msra.mxu0 0.0
    %492 = vmatpush.msra.mxu0 0.0
    %493 = vmatpush.msra.mxu0 0.0
    %494 = vmatpush.msra.mxu0 0.0
    %495 = vmatpush.msra.mxu0 0.0
    %496 = vmatpush.msra.mxu0 0.0
    %497 = vmatpush.msra.mxu0 0.0
    %498 = vmatpush.msra.mxu0 0.0
    %499 = vmatpush.msra.mxu0 0.0
    %500 = vmatpush.msra.mxu0 0.0
    %501 = vmatpush.msra.mxu0 %v107
    %502 = vmatpush.msra.mxu0 %v105
    %503 = vmatpush.msra.mxu0 %v103
    %504 = vmatpush.msra.mxu0 %v101
    %505 = vmatmul.f32.gmra.mxu0 %v467
    %v506 = vpop.f32.mrf.mxu0
    %v507 = vadd.f32 %v462, %v506
    %508 = vdwg.mxu0
    %v509 = vadd.f32 %v487, %v158
    %v510 = vadd.f32 %v507, %v159
    %v511 = vxor.u32 %v509, 2147483648
    %v512 = vmul.f32 %v511, 1.442695
    %v513 = vpow.pop %v512
    %v514 = vadd.f32 %v513, 1.0
    %v515 = vrcp.pop %v514
    %v516 = vmul.f32 %v514, %v515
    %v517 = vsub.f32 1.0, %v516
    %v518 = vmul.f32 %v515, %v517
    %v519 = vadd.f32 %v515, %v518
    %vm520 = vweird.f32 %v514
    %vm521 = vweird.f32 %v515
    %vm522 = vmor %vm520, %vm521
    %v523 = vsel %vm522, %v515, %v519
    %v524 = vand.u32 2147483647, %v514
    %vm525 = vcmp.eq.f32.partialorder %v524, 8.507059e+37
    %v526 = vand.u32 %v514, 2147483648
    %v527 = vor.u32 1.1754944e-38, %v526
    %v528 = vsel %vm525, %v527, %v523
    %v529 = vmul.f32 1.0, %v528
    %v530 = vtanh.pop %v510
    %v531 = vxor.u32 %v510, 2147483648
    %v532 = vmul.f32 %v531, 1.442695
    %v533 = vpow.pop %v532
    %v534 = vadd.f32 %v533, 1.0
    %v535 = vrcp.pop %v534
    %v536 = vmul.f32 %v534, %v535
    %v537 = vsub.f32 1.0, %v536
    %v538 = vmul.f32 %v535, %v537
    %v539 = vadd.f32 %v535, %v538
    %vm540 = vweird.f32 %v534
    %vm541 = vweird.f32 %v535
    %vm542 = vmor %vm540, %vm541
    %v543 = vsel %vm542, %v535, %v539
    %v544 = vand.u32 2147483647, %v534
    %vm545 = vcmp.eq.f32.partialorder %v544, 8.507059e+37
    %v546 = vand.u32 %v534, 2147483648
    %v547 = vor.u32 1.1754944e-38, %v546
    %v548 = vsel %vm545, %v547, %v543
    %v549 = vmul.f32 1.0, %v548
    %v550 = vmul.f32 %v529, %v358
    %v551 = vmul.f32 %v529, %v530
    %553 = vrot.lane.b32.xlu0 %v551, 64
    %v554 = vpop.permute.xlu0 %553
    %v556 = vadd.f32 %v550, %v554
    %v557 = vtanh.pop %v556
    %v558 = vmul.f32 %v549, %v557
    %559 = vmatpush.msra.mxu0 0.0
    %560 = vmatpush.msra.mxu0 0.0
    %561 = vmatpush.msra.mxu0 0.0
    %562 = vmatpush.msra.mxu0 0.0
    %563 = vmatpush.msra.mxu0 0.0
    %564 = vmatpush.msra.mxu0 0.0
    %565 = vmatpush.msra.mxu0 0.0
    %566 = vmatpush.msra.mxu0 0.0
    %567 = vmatpush.msra.mxu0 0.0
    %568 = vmatpush.msra.mxu0 0.0
    %569 = vmatpush.msra.mxu0 0.0
    %570 = vmatpush.msra.mxu0 0.0
    %571 = vmatpush.msra.mxu0 %v99
    %572 = vmatpush.msra.mxu0 %v98
    %573 = vmatpush.msra.mxu0 %v97
    %574 = vmatpush.msra.mxu0 %v96
    %575 = vmatmul.f32.gmra.mxu0 %v467
    %v576 = vpop.f32.mrf.mxu0
    %v577 = vadd.f32 0.0, %v576
    %578 = vdwg.mxu0
    %v579 = vadd.f32 %v154, %v577
    %v580 = vxor.u32 %v579, 2147483648
    %v581 = vmul.f32 %v580, 1.442695
    %v582 = vpow.pop %v581
    %v583 = vadd.f32 %v582, 1.0
    %v584 = vrcp.pop %v583
    %v585 = vmul.f32 %v583, %v584
    %v586 = vsub.f32 1.0, %v585
    %v587 = vmul.f32 %v584, %v586
    %v588 = vadd.f32 %v584, %v587
    %vm589 = vweird.f32 %v583
    %vm590 = vweird.f32 %v584
    %vm591 = vmor %vm589, %vm590
    %v592 = vsel %vm591, %v584, %v588
    %v593 = vand.u32 2147483647, %v583
    %vm594 = vcmp.eq.f32.partialorder %v593, 8.507059e+37
    %v595 = vand.u32 %v583, 2147483648
    %v596 = vor.u32 1.1754944e-38, %v595
    %v597 = vsel %vm594, %v596, %v592
    %v598 = vmul.f32 1.0, %v597
    %v599 = vtanh.pop %v579
    %v600 = vmul.f32 %v598, %v412
    %602 = vrot.lane.b32.xlu0 %v599, 64
    %v603 = vpop.permute.xlu0 %602
    %v605 = vmul.f32 %v598, %v603
    %607 = vrot.lane.b32.xlu0 %v605, 32
    %v608 = vpop.permute.xlu0 %607
    %v610 = vadd.f32 %v600, %v608
    %v611 = vtanh.pop %v610
    %613 = vrot.lane.b32.xlu0 %v611, 64
    %v614 = vpop.permute.xlu0 %613
    %v616 = vmul.f32 %v598, %v614
    %618 = vrot.lane.b32.xlu0 %v558, 64
    %v619 = vpop.permute.xlu0 %618
    %v620 = vsel %vm223, %v619, 0
    %622 = vmatpush.msra.mxu0 0.0
    %623 = vmatpush.msra.mxu0 0.0
    %624 = vmatpush.msra.mxu0 0.0
    %625 = vmatpush.msra.mxu0 0.0
    %626 = vmatpush.msra.mxu0 0.0
    %627 = vmatpush.msra.mxu0 0.0
    %628 = vmatpush.msra.mxu0 0.0
    %629 = vmatpush.msra.mxu0 0.0
    %630 = vmatpush.msra.mxu0 %v122
    %631 = vmatpush.msra.mxu0 %v120
    %632 = vmatpush.msra.mxu0 %v118
    %633 = vmatpush.msra.mxu0 %v116
    %634 = vmatpush.msra.mxu0 %v114
    %635 = vmatpush.msra.mxu0 %v112
    %636 = vmatpush.msra.mxu0 %v110
    %637 = vmatpush.msra.mxu0 %v108
    %638 = vmatmul.f32.gmra.mxu0 %v620
    %v639 = vpop.f32.mrf.mxu0
    %v640 = vadd.f32 0.0, %v639
    %641 = vdwg.mxu0
    %642 = vmatpush.msra.mxu0 0.0
    %643 = vmatpush.msra.mxu0 0.0
    %644 = vmatpush.msra.mxu0 0.0
    %645 = vmatpush.msra.mxu0 0.0
    %646 = vmatpush.msra.mxu0 0.0
    %647 = vmatpush.msra.mxu0 0.0
    %648 = vmatpush.msra.mxu0 0.0
    %649 = vmatpush.msra.mxu0 0.0
    %650 = vmatpush.msra.mxu0 %v123
    %651 = vmatpush.msra.mxu0 %v121
    %652 = vmatpush.msra.mxu0 %v119
    %653 = vmatpush.msra.mxu0 %v117
    %654 = vmatpush.msra.mxu0 %v115
    %655 = vmatpush.msra.mxu0 %v113
    %656 = vmatpush.msra.mxu0 %v111
    %657 = vmatpush.msra.mxu0 %v109
    %658 = vmatmul.f32.gmra.mxu0 %v620
    %v659 = vpop.f32.mrf.mxu0
    %v660 = vadd.f32 0.0, %v659
    %661 = vdwg.mxu0
    %663 = vrot.lane.b32.xlu0 %v616, 32
    %v664 = vpop.permute.xlu0 %663
    %v665 = vsel %vm132, %v664, 0
    %667 = vmatpush.msra.mxu0 0.0
    %668 = vmatpush.msra.mxu0 0.0
    %669 = vmatpush.msra.mxu0 0.0
    %670 = vmatpush.msra.mxu0 0.0
    %671 = vmatpush.msra.mxu0 0.0
    %672 = vmatpush.msra.mxu0 0.0
    %673 = vmatpush.msra.mxu0 0.0
    %674 = vmatpush.msra.mxu0 0.0
    %675 = vmatpush.msra.mxu0 0.0
    %676 = vmatpush.msra.mxu0 0.0
    %677 = vmatpush.msra.mxu0 0.0
    %678 = vmatpush.msra.mxu0 0.0
    %679 = vmatpush.msra.mxu0 %v106
    %680 = vmatpush.msra.mxu0 %v104
    %681 = vmatpush.msra.mxu0 %v102
    %682 = vmatpush.msra.mxu0 %v100
    %683 = vmatmul.f32.gmra.mxu0 %v665
    %v684 = vpop.f32.mrf.mxu0
    %v685 = vadd.f32 %v640, %v684
    %686 = vdwg.mxu0
    %687 = vmatpush.msra.mxu0 0.0
    %688 = vmatpush.msra.mxu0 0.0
    %689 = vmatpush.msra.mxu0 0.0
    %690 = vmatpush.msra.mxu0 0.0
    %691 = vmatpush.msra.mxu0 0.0
    %692 = vmatpush.msra.mxu0 0.0
    %693 = vmatpush.msra.mxu0 0.0
    %694 = vmatpush.msra.mxu0 0.0
    %695 = vmatpush.msra.mxu0 0.0
    %696 = vmatpush.msra.mxu0 0.0
    %697 = vmatpush.msra.mxu0 0.0
    %698 = vmatpush.msra.mxu0 0.0
    %699 = vmatpush.msra.mxu0 %v107
    %700 = vmatpush.msra.mxu0 %v105
    %701 = vmatpush.msra.mxu0 %v103
    %702 = vmatpush.msra.mxu0 %v101
    %703 = vmatmul.f32.gmra.mxu0 %v665
    %v704 = vpop.f32.mrf.mxu0
    %v705 = vadd.f32 %v660, %v704
    %706 = vdwg.mxu0
    %v707 = vadd.f32 %v685, %v158
    %v708 = vadd.f32 %v705, %v159
    %v709 = vxor.u32 %v707, 2147483648
    %v710 = vmul.f32 %v709, 1.442695
    %v711 = vpow.pop %v710
    %v712 = vadd.f32 %v711, 1.0
    %v713 = vrcp.pop %v712
    %v714 = vmul.f32 %v712, %v713
    %v715 = vsub.f32 1.0, %v714
    %v716 = vmul.f32 %v713, %v715
    %v717 = vadd.f32 %v713, %v716
    %vm718 = vweird.f32 %v712
    %vm719 = vweird.f32 %v713
    %vm720 = vmor %vm718, %vm719
    %v721 = vsel %vm720, %v713, %v717
    %v722 = vand.u32 2147483647, %v712
    %vm723 = vcmp.eq.f32.partialorder %v722, 8.507059e+37
    %v724 = vand.u32 %v712, 2147483648
    %v725 = vor.u32 1.1754944e-38, %v724
    %v726 = vsel %vm723, %v725, %v721
    %v727 = vmul.f32 1.0, %v726
    %v728 = vtanh.pop %v708
    %v729 = vxor.u32 %v708, 2147483648
    %v730 = vmul.f32 %v729, 1.442695
    %v731 = vpow.pop %v730
    %v732 = vadd.f32 %v731, 1.0
    %v733 = vrcp.pop %v732
    %v734 = vmul.f32 %v732, %v733
    %v735 = vsub.f32 1.0, %v734
    %v736 = vmul.f32 %v733, %v735
    %v737 = vadd.f32 %v733, %v736
    %vm738 = vweird.f32 %v732
    %vm739 = vweird.f32 %v733
    %vm740 = vmor %vm738, %vm739
    %v741 = vsel %vm740, %v733, %v737
    %v742 = vand.u32 2147483647, %v732
    %vm743 = vcmp.eq.f32.partialorder %v742, 8.507059e+37
    %v744 = vand.u32 %v732, 2147483648
    %v745 = vor.u32 1.1754944e-38, %v744
    %v746 = vsel %vm743, %v745, %v741
    %v747 = vmul.f32 1.0, %v746
    %v748 = vmul.f32 %v727, %v556
    %v749 = vmul.f32 %v727, %v728
    %751 = vrot.lane.b32.xlu0 %v749, 64
    %v752 = vpop.permute.xlu0 %751
    %v754 = vadd.f32 %v748, %v752
    %v755 = vtanh.pop %v754
    %v756 = vmul.f32 %v747, %v755
    %757 = vmatpush.msra.mxu0 0.0
    %758 = vmatpush.msra.mxu0 0.0
    %759 = vmatpush.msra.mxu0 0.0
    %760 = vmatpush.msra.mxu0 0.0
    %761 = vmatpush.msra.mxu0 0.0
    %762 = vmatpush.msra.mxu0 0.0
    %763 = vmatpush.msra.mxu0 0.0
    %764 = vmatpush.msra.mxu0 0.0
    %765 = vmatpush.msra.mxu0 0.0
    %766 = vmatpush.msra.mxu0 0.0
    %767 = vmatpush.msra.mxu0 0.0
    %768 = vmatpush.msra.mxu0 0.0
    %769 = vmatpush.msra.mxu0 %v99
    %770 = vmatpush.msra.mxu0 %v98
    %771 = vmatpush.msra.mxu0 %v97
    %772 = vmatpush.msra.mxu0 %v96
    %773 = vmatmul.f32.gmra.mxu0 %v665
    %v774 = vpop.f32.mrf.mxu0
    %v775 = vadd.f32 0.0, %v774
    %776 = vdwg.mxu0
    %v777 = vadd.f32 %v154, %v775
    %v778 = vxor.u32 %v777, 2147483648
    %v779 = vmul.f32 %v778, 1.442695
    %v780 = vpow.pop %v779
    %v781 = vadd.f32 %v780, 1.0
    %v782 = vrcp.pop %v781
    %v783 = vmul.f32 %v781, %v782
    %v784 = vsub.f32 1.0, %v783
    %v785 = vmul.f32 %v782, %v784
    %v786 = vadd.f32 %v782, %v785
    %vm787 = vweird.f32 %v781
    %vm788 = vweird.f32 %v782
    %vm789 = vmor %vm787, %vm788
    %v790 = vsel %vm789, %v782, %v786
    %v791 = vand.u32 2147483647, %v781
    %vm792 = vcmp.eq.f32.partialorder %v791, 8.507059e+37
    %v793 = vand.u32 %v781, 2147483648
    %v794 = vor.u32 1.1754944e-38, %v793
    %v795 = vsel %vm792, %v794, %v790
    %v796 = vmul.f32 1.0, %v795
    %v797 = vtanh.pop %v777
    %v798 = vmul.f32 %v796, %v610
    %800 = vrot.lane.b32.xlu0 %v797, 64
    %v801 = vpop.permute.xlu0 %800
    %v803 = vmul.f32 %v796, %v801
    %805 = vrot.lane.b32.xlu0 %v803, 32
    %v806 = vpop.permute.xlu0 %805
    %v808 = vadd.f32 %v798, %v806
    %v809 = vtanh.pop %v808
    %811 = vrot.lane.b32.xlu0 %v809, 64
    %v812 = vpop.permute.xlu0 %811
    %v814 = vmul.f32 %v796, %v812
    %816 = vrot.lane.b32.xlu0 %v756, 64
    %v817 = vpop.permute.xlu0 %816
    %v818 = vsel %vm223, %v817, 0
    %820 = vmatpush.msra.mxu0 0.0
    %821 = vmatpush.msra.mxu0 0.0
    %822 = vmatpush.msra.mxu0 0.0
    %823 = vmatpush.msra.mxu0 0.0
    %824 = vmatpush.msra.mxu0 0.0
    %825 = vmatpush.msra.mxu0 0.0
    %826 = vmatpush.msra.mxu0 0.0
    %827 = vmatpush.msra.mxu0 0.0
    %828 = vmatpush.msra.mxu0 %v122
    %829 = vmatpush.msra.mxu0 %v120
    %830 = vmatpush.msra.mxu0 %v118
    %831 = vmatpush.msra.mxu0 %v116
    %832 = vmatpush.msra.mxu0 %v114
    %833 = vmatpush.msra.mxu0 %v112
    %834 = vmatpush.msra.mxu0 %v110
    %835 = vmatpush.msra.mxu0 %v108
    %836 = vmatmul.f32.gmra.mxu0 %v818
    %v837 = vpop.f32.mrf.mxu0
    %v838 = vadd.f32 0.0, %v837
    %839 = vdwg.mxu0
    %840 = vmatpush.msra.mxu0 0.0
    %841 = vmatpush.msra.mxu0 0.0
    %842 = vmatpush.msra.mxu0 0.0
    %843 = vmatpush.msra.mxu0 0.0
    %844 = vmatpush.msra.mxu0 0.0
    %845 = vmatpush.msra.mxu0 0.0
    %846 = vmatpush.msra.mxu0 0.0
    %847 = vmatpush.msra.mxu0 0.0
    %848 = vmatpush.msra.mxu0 %v123
    %849 = vmatpush.msra.mxu0 %v121
    %850 = vmatpush.msra.mxu0 %v119
    %851 = vmatpush.msra.mxu0 %v117
    %852 = vmatpush.msra.mxu0 %v115
    %853 = vmatpush.msra.mxu0 %v113
    %854 = vmatpush.msra.mxu0 %v111
    %855 = vmatpush.msra.mxu0 %v109
    %856 = vmatmul.f32.gmra.mxu0 %v818
    %v857 = vpop.f32.mrf.mxu0
    %v858 = vadd.f32 0.0, %v857
    %859 = vdwg.mxu0
    %861 = vrot.lane.b32.xlu0 %v814, 32
    %v862 = vpop.permute.xlu0 %861
    %v863 = vsel %vm132, %v862, 0
    %865 = vmatpush.msra.mxu0 0.0
    %866 = vmatpush.msra.mxu0 0.0
    %867 = vmatpush.msra.mxu0 0.0
    %868 = vmatpush.msra.mxu0 0.0
    %869 = vmatpush.msra.mxu0 0.0
    %870 = vmatpush.msra.mxu0 0.0
    %871 = vmatpush.msra.mxu0 0.0
    %872 = vmatpush.msra.mxu0 0.0
    %873 = vmatpush.msra.mxu0 0.0
    %874 = vmatpush.msra.mxu0 0.0
    %875 = vmatpush.msra.mxu0 0.0
    %876 = vmatpush.msra.mxu0 0.0
    %877 = vmatpush.msra.mxu0 %v106
    %878 = vmatpush.msra.mxu0 %v104
    %879 = vmatpush.msra.mxu0 %v102
    %880 = vmatpush.msra.mxu0 %v100
    %881 = vmatmul.f32.gmra.mxu0 %v863
    %v882 = vpop.f32.mrf.mxu0
    %v883 = vadd.f32 %v838, %v882
    %884 = vdwg.mxu0
    %885 = vmatpush.msra.mxu0 0.0
    %886 = vmatpush.msra.mxu0 0.0
    %887 = vmatpush.msra.mxu0 0.0
    %888 = vmatpush.msra.mxu0 0.0
    %889 = vmatpush.msra.mxu0 0.0
    %890 = vmatpush.msra.mxu0 0.0
    %891 = vmatpush.msra.mxu0 0.0
    %892 = vmatpush.msra.mxu0 0.0
    %893 = vmatpush.msra.mxu0 0.0
    %894 = vmatpush.msra.mxu0 0.0
    %895 = vmatpush.msra.mxu0 0.0
    %896 = vmatpush.msra.mxu0 0.0
    %897 = vmatpush.msra.mxu0 %v107
    %898 = vmatpush.msra.mxu0 %v105
    %899 = vmatpush.msra.mxu0 %v103
    %900 = vmatpush.msra.mxu0 %v101
    %901 = vmatmul.f32.gmra.mxu0 %v863
    %v902 = vpop.f32.mrf.mxu0
    %v903 = vadd.f32 %v858, %v902
    %904 = vdwg.mxu0
    %v905 = vadd.f32 %v883, %v158
    %v906 = vadd.f32 %v903, %v159
    %v907 = vxor.u32 %v905, 2147483648
    %v908 = vmul.f32 %v907, 1.442695
    %v909 = vpow.pop %v908
    %v910 = vadd.f32 %v909, 1.0
    %v911 = vrcp.pop %v910
    %v912 = vmul.f32 %v910, %v911
    %v913 = vsub.f32 1.0, %v912
    %v914 = vmul.f32 %v911, %v913
    %v915 = vadd.f32 %v911, %v914
    %vm916 = vweird.f32 %v910
    %vm917 = vweird.f32 %v911
    %vm918 = vmor %vm916, %vm917
    %v919 = vsel %vm918, %v911, %v915
    %v920 = vand.u32 2147483647, %v910
    %vm921 = vcmp.eq.f32.partialorder %v920, 8.507059e+37
    %v922 = vand.u32 %v910, 2147483648
    %v923 = vor.u32 1.1754944e-38, %v922
    %v924 = vsel %vm921, %v923, %v919
    %v925 = vmul.f32 1.0, %v924
    %v926 = vtanh.pop %v906
    %v927 = vxor.u32 %v906, 2147483648
    %v928 = vmul.f32 %v927, 1.442695
    %v929 = vpow.pop %v928
    %v930 = vadd.f32 %v929, 1.0
    %v931 = vrcp.pop %v930
    %v932 = vmul.f32 %v930, %v931
    %v933 = vsub.f32 1.0, %v932
    %v934 = vmul.f32 %v931, %v933
    %v935 = vadd.f32 %v931, %v934
    %vm936 = vweird.f32 %v930
    %vm937 = vweird.f32 %v931
    %vm938 = vmor %vm936, %vm937
    %v939 = vsel %vm938, %v931, %v935
    %v940 = vand.u32 2147483647, %v930
    %vm941 = vcmp.eq.f32.partialorder %v940, 8.507059e+37
    %v942 = vand.u32 %v930, 2147483648
    %v943 = vor.u32 1.1754944e-38, %v942
    %v944 = vsel %vm941, %v943, %v939
    %v945 = vmul.f32 1.0, %v944
    %v946 = vmul.f32 %v925, %v754
    %v947 = vmul.f32 %v925, %v926
    %949 = vrot.lane.b32.xlu0 %v947, 64
    %v950 = vpop.permute.xlu0 %949
    %v952 = vadd.f32 %v946, %v950
    %v953 = vtanh.pop %v952
    %v954 = vmul.f32 %v945, %v953
    %955 = vmatpush.msra.mxu0 0.0
    %956 = vmatpush.msra.mxu0 0.0
    %957 = vmatpush.msra.mxu0 0.0
    %958 = vmatpush.msra.mxu0 0.0
    %959 = vmatpush.msra.mxu0 0.0
    %960 = vmatpush.msra.mxu0 0.0
    %961 = vmatpush.msra.mxu0 0.0
    %962 = vmatpush.msra.mxu0 0.0
    %963 = vmatpush.msra.mxu0 0.0
    %964 = vmatpush.msra.mxu0 0.0
    %965 = vmatpush.msra.mxu0 0.0
    %966 = vmatpush.msra.mxu0 0.0
    %967 = vmatpush.msra.mxu0 %v99
    %968 = vmatpush.msra.mxu0 %v98
    %969 = vmatpush.msra.mxu0 %v97
    %970 = vmatpush.msra.mxu0 %v96
    %971 = vmatmul.f32.gmra.mxu0 %v863
    %v972 = vpop.f32.mrf.mxu0
    %v973 = vadd.f32 0.0, %v972
    %974 = vdwg.mxu0
    %v975 = vadd.f32 %v154, %v973
    %v976 = vxor.u32 %v975, 2147483648
    %v977 = vmul.f32 %v976, 1.442695
    %v978 = vpow.pop %v977
    %v979 = vadd.f32 %v978, 1.0
    %v980 = vrcp.pop %v979
    %v981 = vmul.f32 %v979, %v980
    %v982 = vsub.f32 1.0, %v981
    %v983 = vmul.f32 %v980, %v982
    %v984 = vadd.f32 %v980, %v983
    %vm985 = vweird.f32 %v979
    %vm986 = vweird.f32 %v980
    %vm987 = vmor %vm985, %vm986
    %v988 = vsel %vm987, %v980, %v984
    %v989 = vand.u32 2147483647, %v979
    %vm990 = vcmp.eq.f32.partialorder %v989, 8.507059e+37
    %v991 = vand.u32 %v979, 2147483648
    %v992 = vor.u32 1.1754944e-38, %v991
    %v993 = vsel %vm990, %v992, %v988
    %v994 = vmul.f32 1.0, %v993
    %v995 = vtanh.pop %v975
    %v996 = vmul.f32 %v994, %v808
    %998 = vrot.lane.b32.xlu0 %v995, 64
    %v999 = vpop.permute.xlu0 %998
    %v1001 = vmul.f32 %v994, %v999
    %1003 = vrot.lane.b32.xlu0 %v1001, 32
    %v1004 = vpop.permute.xlu0 %1003
    %v1006 = vadd.f32 %v996, %v1004
    %v1007 = vtanh.pop %v1006
    %1009 = vrot.lane.b32.xlu0 %v1007, 64
    %v1010 = vpop.permute.xlu0 %1009
    %v1012 = vmul.f32 %v994, %v1010
    %1014 = vrot.lane.b32.xlu0 %v954, 64
    %v1015 = vpop.permute.xlu0 %1014
    %v1016 = vsel %vm223, %v1015, 0
    %1018 = vmatpush.msra.mxu0 0.0
    %1019 = vmatpush.msra.mxu0 0.0
    %1020 = vmatpush.msra.mxu0 0.0
    %1021 = vmatpush.msra.mxu0 0.0
    %1022 = vmatpush.msra.mxu0 0.0
    %1023 = vmatpush.msra.mxu0 0.0
    %1024 = vmatpush.msra.mxu0 0.0
    %1025 = vmatpush.msra.mxu0 0.0
    %1026 = vmatpush.msra.mxu0 %v122
    %1027 = vmatpush.msra.mxu0 %v120
    %1028 = vmatpush.msra.mxu0 %v118
    %1029 = vmatpush.msra.mxu0 %v116
    %1030 = vmatpush.msra.mxu0 %v114
    %1031 = vmatpush.msra.mxu0 %v112
    %1032 = vmatpush.msra.mxu0 %v110
    %1033 = vmatpush.msra.mxu0 %v108
    %1034 = vmatmul.f32.gmra.mxu0 %v1016
    %v1035 = vpop.f32.mrf.mxu0
    %v1036 = vadd.f32 0.0, %v1035
    %1037 = vdwg.mxu0
    %1038 = vmatpush.msra.mxu0 0.0
    %1039 = vmatpush.msra.mxu0 0.0
    %1040 = vmatpush.msra.mxu0 0.0
    %1041 = vmatpush.msra.mxu0 0.0
    %1042 = vmatpush.msra.mxu0 0.0
    %1043 = vmatpush.msra.mxu0 0.0
    %1044 = vmatpush.msra.mxu0 0.0
    %1045 = vmatpush.msra.mxu0 0.0
    %1046 = vmatpush.msra.mxu0 %v123
    %1047 = vmatpush.msra.mxu0 %v121
    %1048 = vmatpush.msra.mxu0 %v119
    %1049 = vmatpush.msra.mxu0 %v117
    %1050 = vmatpush.msra.mxu0 %v115
    %1051 = vmatpush.msra.mxu0 %v113
    %1052 = vmatpush.msra.mxu0 %v111
    %1053 = vmatpush.msra.mxu0 %v109
    %1054 = vmatmul.f32.gmra.mxu0 %v1016
    %v1055 = vpop.f32.mrf.mxu0
    %v1056 = vadd.f32 0.0, %v1055
    %1057 = vdwg.mxu0
    %1059 = vrot.lane.b32.xlu0 %v1012, 32
    %v1060 = vpop.permute.xlu0 %1059
    %v1061 = vsel %vm132, %v1060, 0
    %1063 = vmatpush.msra.mxu0 0.0
    %1064 = vmatpush.msra.mxu0 0.0
    %1065 = vmatpush.msra.mxu0 0.0
    %1066 = vmatpush.msra.mxu0 0.0
    %1067 = vmatpush.msra.mxu0 0.0
    %1068 = vmatpush.msra.mxu0 0.0
    %1069 = vmatpush.msra.mxu0 0.0
    %1070 = vmatpush.msra.mxu0 0.0
    %1071 = vmatpush.msra.mxu0 0.0
    %1072 = vmatpush.msra.mxu0 0.0
    %1073 = vmatpush.msra.mxu0 0.0
    %1074 = vmatpush.msra.mxu0 0.0
    %1075 = vmatpush.msra.mxu0 %v106
    %1076 = vmatpush.msra.mxu0 %v104
    %1077 = vmatpush.msra.mxu0 %v102
    %1078 = vmatpush.msra.mxu0 %v100
    %1079 = vmatmul.f32.gmra.mxu0 %v1061
    %v1080 = vpop.f32.mrf.mxu0
    %v1081 = vadd.f32 %v1036, %v1080
    %1082 = vdwg.mxu0
    %1083 = vmatpush.msra.mxu0 0.0
    %1084 = vmatpush.msra.mxu0 0.0
    %1085 = vmatpush.msra.mxu0 0.0
    %1086 = vmatpush.msra.mxu0 0.0
    %1087 = vmatpush.msra.mxu0 0.0
    %1088 = vmatpush.msra.mxu0 0.0
    %1089 = vmatpush.msra.mxu0 0.0
    %1090 = vmatpush.msra.mxu0 0.0
    %1091 = vmatpush.msra.mxu0 0.0
    %1092 = vmatpush.msra.mxu0 0.0
    %1093 = vmatpush.msra.mxu0 0.0
    %1094 = vmatpush.msra.mxu0 0.0
    %1095 = vmatpush.msra.mxu0 %v107
    %1096 = vmatpush.msra.mxu0 %v105
    %1097 = vmatpush.msra.mxu0 %v103
    %1098 = vmatpush.msra.mxu0 %v101
    %1099 = vmatmul.f32.gmra.mxu0 %v1061
    %v1100 = vpop.f32.mrf.mxu0
    %v1101 = vadd.f32 %v1056, %v1100
    %1102 = vdwg.mxu0
    %v1103 = vadd.f32 %v1081, %v158
    %v1104 = vadd.f32 %v1101, %v159
    %v1105 = vxor.u32 %v1103, 2147483648
    %v1106 = vmul.f32 %v1105, 1.442695
    %v1107 = vpow.pop %v1106
    %v1108 = vadd.f32 %v1107, 1.0
    %v1109 = vrcp.pop %v1108
    %v1110 = vmul.f32 %v1108, %v1109
    %v1111 = vsub.f32 1.0, %v1110
    %v1112 = vmul.f32 %v1109, %v1111
    %v1113 = vadd.f32 %v1109, %v1112
    %vm1114 = vweird.f32 %v1108
    %vm1115 = vweird.f32 %v1109
    %vm1116 = vmor %vm1114, %vm1115
    %v1117 = vsel %vm1116, %v1109, %v1113
    %v1118 = vand.u32 2147483647, %v1108
    %vm1119 = vcmp.eq.f32.partialorder %v1118, 8.507059e+37
    %v1120 = vand.u32 %v1108, 2147483648
    %v1121 = vor.u32 1.1754944e-38, %v1120
    %v1122 = vsel %vm1119, %v1121, %v1117
    %v1123 = vmul.f32 1.0, %v1122
    %v1124 = vtanh.pop %v1104
    %v1125 = vxor.u32 %v1104, 2147483648
    %v1126 = vmul.f32 %v1125, 1.442695
    %v1127 = vpow.pop %v1126
    %v1128 = vadd.f32 %v1127, 1.0
    %v1129 = vrcp.pop %v1128
    %v1130 = vmul.f32 %v1128, %v1129
    %v1131 = vsub.f32 1.0, %v1130
    %v1132 = vmul.f32 %v1129, %v1131
    %v1133 = vadd.f32 %v1129, %v1132
    %vm1134 = vweird.f32 %v1128
    %vm1135 = vweird.f32 %v1129
    %vm1136 = vmor %vm1134, %vm1135
    %v1137 = vsel %vm1136, %v1129, %v1133
    %v1138 = vand.u32 2147483647, %v1128
    %vm1139 = vcmp.eq.f32.partialorder %v1138, 8.507059e+37
    %v1140 = vand.u32 %v1128, 2147483648
    %v1141 = vor.u32 1.1754944e-38, %v1140
    %v1142 = vsel %vm1139, %v1141, %v1137
    %v1143 = vmul.f32 1.0, %v1142
    %v1144 = vmul.f32 %v1123, %v952
    %v1145 = vmul.f32 %v1123, %v1124
    %1147 = vrot.lane.b32.xlu0 %v1145, 64
    %v1148 = vpop.permute.xlu0 %1147
    %v1150 = vadd.f32 %v1144, %v1148
    %v1151 = vtanh.pop %v1150
    %v1152 = vmul.f32 %v1143, %v1151
    %1153 = vmatpush.msra.mxu0 0.0
    %1154 = vmatpush.msra.mxu0 0.0
    %1155 = vmatpush.msra.mxu0 0.0
    %1156 = vmatpush.msra.mxu0 0.0
    %1157 = vmatpush.msra.mxu0 0.0
    %1158 = vmatpush.msra.mxu0 0.0
    %1159 = vmatpush.msra.mxu0 0.0
    %1160 = vmatpush.msra.mxu0 0.0
    %1161 = vmatpush.msra.mxu0 0.0
    %1162 = vmatpush.msra.mxu0 0.0
    %1163 = vmatpush.msra.mxu0 0.0
    %1164 = vmatpush.msra.mxu0 0.0
    %1165 = vmatpush.msra.mxu0 %v99
    %1166 = vmatpush.msra.mxu0 %v98
    %1167 = vmatpush.msra.mxu0 %v97
    %1168 = vmatpush.msra.mxu0 %v96
    %1169 = vmatmul.f32.gmra.mxu0 %v1061
    %v1170 = vpop.f32.mrf.mxu0
    %v1171 = vadd.f32 0.0, %v1170
    %1172 = vdwg.mxu0
    %v1173 = vadd.f32 %v154, %v1171
    %v1174 = vxor.u32 %v1173, 2147483648
    %v1175 = vmul.f32 %v1174, 1.442695
    %v1176 = vpow.pop %v1175
    %v1177 = vadd.f32 %v1176, 1.0
    %v1178 = vrcp.pop %v1177
    %v1179 = vmul.f32 %v1177, %v1178
    %v1180 = vsub.f32 1.0, %v1179
    %v1181 = vmul.f32 %v1178, %v1180
    %v1182 = vadd.f32 %v1178, %v1181
    %vm1183 = vweird.f32 %v1177
    %vm1184 = vweird.f32 %v1178
    %vm1185 = vmor %vm1183, %vm1184
    %v1186 = vsel %vm1185, %v1178, %v1182
    %v1187 = vand.u32 2147483647, %v1177
    %vm1188 = vcmp.eq.f32.partialorder %v1187, 8.507059e+37
    %v1189 = vand.u32 %v1177, 2147483648
    %v1190 = vor.u32 1.1754944e-38, %v1189
    %v1191 = vsel %vm1188, %v1190, %v1186
    %v1192 = vmul.f32 1.0, %v1191
    %v1193 = vtanh.pop %v1173
    %v1194 = vmul.f32 %v1192, %v1006
    %1196 = vrot.lane.b32.xlu0 %v1193, 64
    %v1197 = vpop.permute.xlu0 %1196
    %v1199 = vmul.f32 %v1192, %v1197
    %1201 = vrot.lane.b32.xlu0 %v1199, 32
    %v1202 = vpop.permute.xlu0 %1201
    %v1204 = vadd.f32 %v1194, %v1202
    %v1205 = vtanh.pop %v1204
    %1207 = vrot.lane.b32.xlu0 %v1205, 64
    %v1208 = vpop.permute.xlu0 %1207
    %v1210 = vmul.f32 %v1192, %v1208
    %1212 = vrot.lane.b32.xlu0 %v1152, 64
    %v1213 = vpop.permute.xlu0 %1212
    %v1214 = vsel %vm223, %v1213, 0
    %1216 = vmatpush.msra.mxu0 0.0
    %1217 = vmatpush.msra.mxu0 0.0
    %1218 = vmatpush.msra.mxu0 0.0
    %1219 = vmatpush.msra.mxu0 0.0
    %1220 = vmatpush.msra.mxu0 0.0
    %1221 = vmatpush.msra.mxu0 0.0
    %1222 = vmatpush.msra.mxu0 0.0
    %1223 = vmatpush.msra.mxu0 0.0
    %1224 = vmatpush.msra.mxu0 %v122
    %1225 = vmatpush.msra.mxu0 %v120
    %1226 = vmatpush.msra.mxu0 %v118
    %1227 = vmatpush.msra.mxu0 %v116
    %1228 = vmatpush.msra.mxu0 %v114
    %1229 = vmatpush.msra.mxu0 %v112
    %1230 = vmatpush.msra.mxu0 %v110
    %1231 = vmatpush.msra.mxu0 %v108
    %1232 = vmatmul.f32.gmra.mxu0 %v1214
    %v1233 = vpop.f32.mrf.mxu0
    %v1234 = vadd.f32 0.0, %v1233
    %1235 = vdwg.mxu0
    %1236 = vmatpush.msra.mxu0 0.0
    %1237 = vmatpush.msra.mxu0 0.0
    %1238 = vmatpush.msra.mxu0 0.0
    %1239 = vmatpush.msra.mxu0 0.0
    %1240 = vmatpush.msra.mxu0 0.0
    %1241 = vmatpush.msra.mxu0 0.0
    %1242 = vmatpush.msra.mxu0 0.0
    %1243 = vmatpush.msra.mxu0 0.0
    %1244 = vmatpush.msra.mxu0 %v123
    %1245 = vmatpush.msra.mxu0 %v121
    %1246 = vmatpush.msra.mxu0 %v119
    %1247 = vmatpush.msra.mxu0 %v117
    %1248 = vmatpush.msra.mxu0 %v115
    %1249 = vmatpush.msra.mxu0 %v113
    %1250 = vmatpush.msra.mxu0 %v111
    %1251 = vmatpush.msra.mxu0 %v109
    %1252 = vmatmul.f32.gmra.mxu0 %v1214
    %v1253 = vpop.f32.mrf.mxu0
    %v1254 = vadd.f32 0.0, %v1253
    %1255 = vdwg.mxu0
    %1257 = vrot.lane.b32.xlu0 %v1210, 32
    %v1258 = vpop.permute.xlu0 %1257
    %v1259 = vsel %vm132, %v1258, 0
    %1261 = vmatpush.msra.mxu0 0.0
    %1262 = vmatpush.msra.mxu0 0.0
    %1263 = vmatpush.msra.mxu0 0.0
    %1264 = vmatpush.msra.mxu0 0.0
    %1265 = vmatpush.msra.mxu0 0.0
    %1266 = vmatpush.msra.mxu0 0.0
    %1267 = vmatpush.msra.mxu0 0.0
    %1268 = vmatpush.msra.mxu0 0.0
    %1269 = vmatpush.msra.mxu0 0.0
    %1270 = vmatpush.msra.mxu0 0.0
    %1271 = vmatpush.msra.mxu0 0.0
    %1272 = vmatpush.msra.mxu0 0.0
    %1273 = vmatpush.msra.mxu0 %v106
    %1274 = vmatpush.msra.mxu0 %v104
    %1275 = vmatpush.msra.mxu0 %v102
    %1276 = vmatpush.msra.mxu0 %v100
    %1277 = vmatmul.f32.gmra.mxu0 %v1259
    %v1278 = vpop.f32.mrf.mxu0
    %v1279 = vadd.f32 %v1234, %v1278
    %1280 = vdwg.mxu0
    %1281 = vmatpush.msra.mxu0 0.0
    %1282 = vmatpush.msra.mxu0 0.0
    %1283 = vmatpush.msra.mxu0 0.0
    %1284 = vmatpush.msra.mxu0 0.0
    %1285 = vmatpush.msra.mxu0 0.0
    %1286 = vmatpush.msra.mxu0 0.0
    %1287 = vmatpush.msra.mxu0 0.0
    %1288 = vmatpush.msra.mxu0 0.0
    %1289 = vmatpush.msra.mxu0 0.0
    %1290 = vmatpush.msra.mxu0 0.0
    %1291 = vmatpush.msra.mxu0 0.0
    %1292 = vmatpush.msra.mxu0 0.0
    %1293 = vmatpush.msra.mxu0 %v107
    %1294 = vmatpush.msra.mxu0 %v105
    %1295 = vmatpush.msra.mxu0 %v103
    %1296 = vmatpush.msra.mxu0 %v101
    %1297 = vmatmul.f32.gmra.mxu0 %v1259
    %v1298 = vpop.f32.mrf.mxu0
    %v1299 = vadd.f32 %v1254, %v1298
    %1300 = vdwg.mxu0
    %v1301 = vadd.f32 %v1279, %v158
    %v1302 = vadd.f32 %v1299, %v159
    %v1303 = vxor.u32 %v1301, 2147483648
    %v1304 = vmul.f32 %v1303, 1.442695
    %v1305 = vpow.pop %v1304
    %v1306 = vadd.f32 %v1305, 1.0
    %v1307 = vrcp.pop %v1306
    %v1308 = vmul.f32 %v1306, %v1307
    %v1309 = vsub.f32 1.0, %v1308
    %v1310 = vmul.f32 %v1307, %v1309
    %v1311 = vadd.f32 %v1307, %v1310
    %vm1312 = vweird.f32 %v1306
    %vm1313 = vweird.f32 %v1307
    %vm1314 = vmor %vm1312, %vm1313
    %v1315 = vsel %vm1314, %v1307, %v1311
    %v1316 = vand.u32 2147483647, %v1306
    %vm1317 = vcmp.eq.f32.partialorder %v1316, 8.507059e+37
    %v1318 = vand.u32 %v1306, 2147483648
    %v1319 = vor.u32 1.1754944e-38, %v1318
    %v1320 = vsel %vm1317, %v1319, %v1315
    %v1321 = vmul.f32 1.0, %v1320
    %v1322 = vtanh.pop %v1302
    %v1323 = vxor.u32 %v1302, 2147483648
    %v1324 = vmul.f32 %v1323, 1.442695
    %v1325 = vpow.pop %v1324
    %v1326 = vadd.f32 %v1325, 1.0
    %v1327 = vrcp.pop %v1326
    %v1328 = vmul.f32 %v1326, %v1327
    %v1329 = vsub.f32 1.0, %v1328
    %v1330 = vmul.f32 %v1327, %v1329
    %v1331 = vadd.f32 %v1327, %v1330
    %vm1332 = vweird.f32 %v1326
    %vm1333 = vweird.f32 %v1327
    %vm1334 = vmor %vm1332, %vm1333
    %v1335 = vsel %vm1334, %v1327, %v1331
    %v1336 = vand.u32 2147483647, %v1326
    %vm1337 = vcmp.eq.f32.partialorder %v1336, 8.507059e+37
    %v1338 = vand.u32 %v1326, 2147483648
    %v1339 = vor.u32 1.1754944e-38, %v1338
    %v1340 = vsel %vm1337, %v1339, %v1335
    %v1341 = vmul.f32 1.0, %v1340
    %v1342 = vmul.f32 %v1321, %v1150
    %v1343 = vmul.f32 %v1321, %v1322
    %1345 = vrot.lane.b32.xlu0 %v1343, 64
    %v1346 = vpop.permute.xlu0 %1345
    %v1348 = vadd.f32 %v1342, %v1346
    %v1349 = vtanh.pop %v1348
    %v1350 = vmul.f32 %v1341, %v1349
    %1351 = vmatpush.msra.mxu0 0.0
    %1352 = vmatpush.msra.mxu0 0.0
    %1353 = vmatpush.msra.mxu0 0.0
    %1354 = vmatpush.msra.mxu0 0.0
    %1355 = vmatpush.msra.mxu0 0.0
    %1356 = vmatpush.msra.mxu0 0.0
    %1357 = vmatpush.msra.mxu0 0.0
    %1358 = vmatpush.msra.mxu0 0.0
    %1359 = vmatpush.msra.mxu0 0.0
    %1360 = vmatpush.msra.mxu0 0.0
    %1361 = vmatpush.msra.mxu0 0.0
    %1362 = vmatpush.msra.mxu0 0.0
    %1363 = vmatpush.msra.mxu0 %v99
    %1364 = vmatpush.msra.mxu0 %v98
    %1365 = vmatpush.msra.mxu0 %v97
    %1366 = vmatpush.msra.mxu0 %v96
    %1367 = vmatmul.f32.gmra.mxu0 %v1259
    %v1368 = vpop.f32.mrf.mxu0
    %v1369 = vadd.f32 0.0, %v1368
    %1370 = vdwg.mxu0
    %v1371 = vadd.f32 %v154, %v1369
    %v1372 = vxor.u32 %v1371, 2147483648
    %v1373 = vmul.f32 %v1372, 1.442695
    %v1374 = vpow.pop %v1373
    %v1375 = vadd.f32 %v1374, 1.0
    %v1376 = vrcp.pop %v1375
    %v1377 = vmul.f32 %v1375, %v1376
    %v1378 = vsub.f32 1.0, %v1377
    %v1379 = vmul.f32 %v1376, %v1378
    %v1380 = vadd.f32 %v1376, %v1379
    %vm1381 = vweird.f32 %v1375
    %vm1382 = vweird.f32 %v1376
    %vm1383 = vmor %vm1381, %vm1382
    %v1384 = vsel %vm1383, %v1376, %v1380
    %v1385 = vand.u32 2147483647, %v1375
    %vm1386 = vcmp.eq.f32.partialorder %v1385, 8.507059e+37
    %v1387 = vand.u32 %v1375, 2147483648
    %v1388 = vor.u32 1.1754944e-38, %v1387
    %v1389 = vsel %vm1386, %v1388, %v1384
    %v1390 = vmul.f32 1.0, %v1389
    %v1391 = vtanh.pop %v1371
    %v1392 = vmul.f32 %v1390, %v1204
    %1394 = vrot.lane.b32.xlu0 %v1391, 64
    %v1395 = vpop.permute.xlu0 %1394
    %v1397 = vmul.f32 %v1390, %v1395
    %1399 = vrot.lane.b32.xlu0 %v1397, 32
    %v1400 = vpop.permute.xlu0 %1399
    %v1402 = vadd.f32 %v1392, %v1400
    %v1403 = vtanh.pop %v1402
    %1405 = vrot.lane.b32.xlu0 %v1403, 64
    %v1406 = vpop.permute.xlu0 %1405
    %v1408 = vmul.f32 %v1390, %v1406
    %1410 = vrot.lane.b32.xlu0 %v1350, 64
    %v1411 = vpop.permute.xlu0 %1410
    %v1412 = vsel %vm223, %v1411, 0
    %1414 = vmatpush.msra.mxu0 0.0
    %1415 = vmatpush.msra.mxu0 0.0
    %1416 = vmatpush.msra.mxu0 0.0
    %1417 = vmatpush.msra.mxu0 0.0
    %1418 = vmatpush.msra.mxu0 0.0
    %1419 = vmatpush.msra.mxu0 0.0
    %1420 = vmatpush.msra.mxu0 0.0
    %1421 = vmatpush.msra.mxu0 0.0
    %1422 = vmatpush.msra.mxu0 %v122
    %1423 = vmatpush.msra.mxu0 %v120
    %1424 = vmatpush.msra.mxu0 %v118
    %1425 = vmatpush.msra.mxu0 %v116
    %1426 = vmatpush.msra.mxu0 %v114
    %1427 = vmatpush.msra.mxu0 %v112
    %1428 = vmatpush.msra.mxu0 %v110
    %1429 = vmatpush.msra.mxu0 %v108
    %1430 = vmatmul.f32.gmra.mxu0 %v1412
    %v1431 = vpop.f32.mrf.mxu0
    %v1432 = vadd.f32 0.0, %v1431
    %1433 = vdwg.mxu0
    %1434 = vmatpush.msra.mxu0 0.0
    %1435 = vmatpush.msra.mxu0 0.0
    %1436 = vmatpush.msra.mxu0 0.0
    %1437 = vmatpush.msra.mxu0 0.0
    %1438 = vmatpush.msra.mxu0 0.0
    %1439 = vmatpush.msra.mxu0 0.0
    %1440 = vmatpush.msra.mxu0 0.0
    %1441 = vmatpush.msra.mxu0 0.0
    %1442 = vmatpush.msra.mxu0 %v123
    %1443 = vmatpush.msra.mxu0 %v121
    %1444 = vmatpush.msra.mxu0 %v119
    %1445 = vmatpush.msra.mxu0 %v117
    %1446 = vmatpush.msra.mxu0 %v115
    %1447 = vmatpush.msra.mxu0 %v113
    %1448 = vmatpush.msra.mxu0 %v111
    %1449 = vmatpush.msra.mxu0 %v109
    %1450 = vmatmul.f32.gmra.mxu0 %v1412
    %v1451 = vpop.f32.mrf.mxu0
    %v1452 = vadd.f32 0.0, %v1451
    %1453 = vdwg.mxu0
    %1455 = vrot.lane.b32.xlu0 %v1408, 32
    %v1456 = vpop.permute.xlu0 %1455
    %v1457 = vsel %vm132, %v1456, 0
    %1459 = vmatpush.msra.mxu0 0.0
    %1460 = vmatpush.msra.mxu0 0.0
    %1461 = vmatpush.msra.mxu0 0.0
    %1462 = vmatpush.msra.mxu0 0.0
    %1463 = vmatpush.msra.mxu0 0.0
    %1464 = vmatpush.msra.mxu0 0.0
    %1465 = vmatpush.msra.mxu0 0.0
    %1466 = vmatpush.msra.mxu0 0.0
    %1467 = vmatpush.msra.mxu0 0.0
    %1468 = vmatpush.msra.mxu0 0.0
    %1469 = vmatpush.msra.mxu0 0.0
    %1470 = vmatpush.msra.mxu0 0.0
    %1471 = vmatpush.msra.mxu0 %v106
    %1472 = vmatpush.msra.mxu0 %v104
    %1473 = vmatpush.msra.mxu0 %v102
    %1474 = vmatpush.msra.mxu0 %v100
    %1475 = vmatmul.f32.gmra.mxu0 %v1457
    %v1476 = vpop.f32.mrf.mxu0
    %v1477 = vadd.f32 %v1432, %v1476
    %1478 = vdwg.mxu0
    %1479 = vmatpush.msra.mxu0 0.0
    %1480 = vmatpush.msra.mxu0 0.0
    %1481 = vmatpush.msra.mxu0 0.0
    %1482 = vmatpush.msra.mxu0 0.0
    %1483 = vmatpush.msra.mxu0 0.0
    %1484 = vmatpush.msra.mxu0 0.0
    %1485 = vmatpush.msra.mxu0 0.0
    %1486 = vmatpush.msra.mxu0 0.0
    %1487 = vmatpush.msra.mxu0 0.0
    %1488 = vmatpush.msra.mxu0 0.0
    %1489 = vmatpush.msra.mxu0 0.0
    %1490 = vmatpush.msra.mxu0 0.0
    %1491 = vmatpush.msra.mxu0 %v107
    %1492 = vmatpush.msra.mxu0 %v105
    %1493 = vmatpush.msra.mxu0 %v103
    %1494 = vmatpush.msra.mxu0 %v101
    %1495 = vmatmul.f32.gmra.mxu0 %v1457
    %v1496 = vpop.f32.mrf.mxu0
    %v1497 = vadd.f32 %v1452, %v1496
    %1498 = vdwg.mxu0
    %v1499 = vadd.f32 %v1477, %v158
    %v1500 = vadd.f32 %v1497, %v159
    %v1501 = vxor.u32 %v1499, 2147483648
    %v1502 = vmul.f32 %v1501, 1.442695
    %v1503 = vpow.pop %v1502
    %v1504 = vadd.f32 %v1503, 1.0
    %v1505 = vrcp.pop %v1504
    %v1506 = vmul.f32 %v1504, %v1505
    %v1507 = vsub.f32 1.0, %v1506
    %v1508 = vmul.f32 %v1505, %v1507
    %v1509 = vadd.f32 %v1505, %v1508
    %vm1510 = vweird.f32 %v1504
    %vm1511 = vweird.f32 %v1505
    %vm1512 = vmor %vm1510, %vm1511
    %v1513 = vsel %vm1512, %v1505, %v1509
    %v1514 = vand.u32 2147483647, %v1504
    %vm1515 = vcmp.eq.f32.partialorder %v1514, 8.507059e+37
    %v1516 = vand.u32 %v1504, 2147483648
    %v1517 = vor.u32 1.1754944e-38, %v1516
    %v1518 = vsel %vm1515, %v1517, %v1513
    %v1519 = vmul.f32 1.0, %v1518
    %v1520 = vtanh.pop %v1500
    %v1521 = vxor.u32 %v1500, 2147483648
    %v1522 = vmul.f32 %v1521, 1.442695
    %v1523 = vpow.pop %v1522
    %v1524 = vadd.f32 %v1523, 1.0
    %v1525 = vrcp.pop %v1524
    %v1526 = vmul.f32 %v1524, %v1525
    %v1527 = vsub.f32 1.0, %v1526
    %v1528 = vmul.f32 %v1525, %v1527
    %v1529 = vadd.f32 %v1525, %v1528
    %vm1530 = vweird.f32 %v1524
    %vm1531 = vweird.f32 %v1525
    %vm1532 = vmor %vm1530, %vm1531
    %v1533 = vsel %vm1532, %v1525, %v1529
    %v1534 = vand.u32 2147483647, %v1524
    %vm1535 = vcmp.eq.f32.partialorder %v1534, 8.507059e+37
    %v1536 = vand.u32 %v1524, 2147483648
    %v1537 = vor.u32 1.1754944e-38, %v1536
    %v1538 = vsel %vm1535, %v1537, %v1533
    %v1539 = vmul.f32 1.0, %v1538
    %v1540 = vmul.f32 %v1519, %v1348
    %v1541 = vmul.f32 %v1519, %v1520
    %1543 = vrot.lane.b32.xlu0 %v1541, 64
    %v1544 = vpop.permute.xlu0 %1543
    %v1546 = vadd.f32 %v1540, %v1544
    %v1547 = vtanh.pop %v1546
    %v1548 = vmul.f32 %v1539, %v1547
    %1549 = vmatpush.msra.mxu0 0.0
    %1550 = vmatpush.msra.mxu0 0.0
    %1551 = vmatpush.msra.mxu0 0.0
    %1552 = vmatpush.msra.mxu0 0.0
    %1553 = vmatpush.msra.mxu0 0.0
    %1554 = vmatpush.msra.mxu0 0.0
    %1555 = vmatpush.msra.mxu0 0.0
    %1556 = vmatpush.msra.mxu0 0.0
    %1557 = vmatpush.msra.mxu0 0.0
    %1558 = vmatpush.msra.mxu0 0.0
    %1559 = vmatpush.msra.mxu0 0.0
    %1560 = vmatpush.msra.mxu0 0.0
    %1561 = vmatpush.msra.mxu0 %v99
    %1562 = vmatpush.msra.mxu0 %v98
    %1563 = vmatpush.msra.mxu0 %v97
    %1564 = vmatpush.msra.mxu0 %v96
    %1565 = vmatmul.f32.gmra.mxu0 %v1457
    %v1566 = vpop.f32.mrf.mxu0
    %v1567 = vadd.f32 0.0, %v1566
    %1568 = vdwg.mxu0
    %v1569 = vadd.f32 %v154, %v1567
    %v1570 = vxor.u32 %v1569, 2147483648
    %v1571 = vmul.f32 %v1570, 1.442695
    %v1572 = vpow.pop %v1571
    %v1573 = vadd.f32 %v1572, 1.0
    %v1574 = vrcp.pop %v1573
    %v1575 = vmul.f32 %v1573, %v1574
    %v1576 = vsub.f32 1.0, %v1575
    %v1577 = vmul.f32 %v1574, %v1576
    %v1578 = vadd.f32 %v1574, %v1577
    %vm1579 = vweird.f32 %v1573
    %vm1580 = vweird.f32 %v1574
    %vm1581 = vmor %vm1579, %vm1580
    %v1582 = vsel %vm1581, %v1574, %v1578
    %v1583 = vand.u32 2147483647, %v1573
    %vm1584 = vcmp.eq.f32.partialorder %v1583, 8.507059e+37
    %v1585 = vand.u32 %v1573, 2147483648
    %v1586 = vor.u32 1.1754944e-38, %v1585
    %v1587 = vsel %vm1584, %v1586, %v1582
    %v1588 = vmul.f32 1.0, %v1587
    %v1589 = vtanh.pop %v1569
    %v1590 = vmul.f32 %v1588, %v1402
    %1592 = vrot.lane.b32.xlu0 %v1589, 64
    %v1593 = vpop.permute.xlu0 %1592
    %v1595 = vmul.f32 %v1588, %v1593
    %1597 = vrot.lane.b32.xlu0 %v1595, 32
    %v1598 = vpop.permute.xlu0 %1597
    %v1600 = vadd.f32 %v1590, %v1598
    %v1601 = vtanh.pop %v1600
    %1603 = vrot.lane.b32.xlu0 %v1601, 64
    %v1604 = vpop.permute.xlu0 %1603
    %v1606 = vmul.f32 %v1588, %v1604
    %1608 = vrot.lane.b32.xlu0 %v1548, 64
    %v1609 = vpop.permute.xlu0 %1608
    %v1610 = vsel %vm223, %v1609, 0
    %1612 = vmatpush.msra.mxu0 0.0
    %1613 = vmatpush.msra.mxu0 0.0
    %1614 = vmatpush.msra.mxu0 0.0
    %1615 = vmatpush.msra.mxu0 0.0
    %1616 = vmatpush.msra.mxu0 0.0
    %1617 = vmatpush.msra.mxu0 0.0
    %1618 = vmatpush.msra.mxu0 0.0
    %1619 = vmatpush.msra.mxu0 0.0
    %1620 = vmatpush.msra.mxu0 %v122
    %1621 = vmatpush.msra.mxu0 %v120
    %1622 = vmatpush.msra.mxu0 %v118
    %1623 = vmatpush.msra.mxu0 %v116
    %1624 = vmatpush.msra.mxu0 %v114
    %1625 = vmatpush.msra.mxu0 %v112
    %1626 = vmatpush.msra.mxu0 %v110
    %1627 = vmatpush.msra.mxu0 %v108
    %1628 = vmatmul.f32.gmra.mxu0 %v1610
    %v1629 = vpop.f32.mrf.mxu0
    %v1630 = vadd.f32 0.0, %v1629
    %1631 = vdwg.mxu0
    %1632 = vmatpush.msra.mxu0 0.0
    %1633 = vmatpush.msra.mxu0 0.0
    %1634 = vmatpush.msra.mxu0 0.0
    %1635 = vmatpush.msra.mxu0 0.0
    %1636 = vmatpush.msra.mxu0 0.0
    %1637 = vmatpush.msra.mxu0 0.0
    %1638 = vmatpush.msra.mxu0 0.0
    %1639 = vmatpush.msra.mxu0 0.0
    %1640 = vmatpush.msra.mxu0 %v123
    %1641 = vmatpush.msra.mxu0 %v121
    %1642 = vmatpush.msra.mxu0 %v119
    %1643 = vmatpush.msra.mxu0 %v117
    %1644 = vmatpush.msra.mxu0 %v115
    %1645 = vmatpush.msra.mxu0 %v113
    %1646 = vmatpush.msra.mxu0 %v111
    %1647 = vmatpush.msra.mxu0 %v109
    %1648 = vmatmul.f32.gmra.mxu0 %v1610
    %v1649 = vpop.f32.mrf.mxu0
    %v1650 = vadd.f32 0.0, %v1649
    %1651 = vdwg.mxu0
    %1653 = vrot.lane.b32.xlu0 %v1606, 32
    %v1654 = vpop.permute.xlu0 %1653
    %v1655 = vsel %vm132, %v1654, 0
    %1657 = vmatpush.msra.mxu0 0.0
    %1658 = vmatpush.msra.mxu0 0.0
    %1659 = vmatpush.msra.mxu0 0.0
    %1660 = vmatpush.msra.mxu0 0.0
    %1661 = vmatpush.msra.mxu0 0.0
    %1662 = vmatpush.msra.mxu0 0.0
    %1663 = vmatpush.msra.mxu0 0.0
    %1664 = vmatpush.msra.mxu0 0.0
    %1665 = vmatpush.msra.mxu0 0.0
    %1666 = vmatpush.msra.mxu0 0.0
    %1667 = vmatpush.msra.mxu0 0.0
    %1668 = vmatpush.msra.mxu0 0.0
    %1669 = vmatpush.msra.mxu0 %v106
    %1670 = vmatpush.msra.mxu0 %v104
    %1671 = vmatpush.msra.mxu0 %v102
    %1672 = vmatpush.msra.mxu0 %v100
    %1673 = vmatmul.f32.gmra.mxu0 %v1655
    %v1674 = vpop.f32.mrf.mxu0
    %v1675 = vadd.f32 %v1630, %v1674
    %1676 = vdwg.mxu0
    %1677 = vmatpush.msra.mxu0 0.0
    %1678 = vmatpush.msra.mxu0 0.0
    %1679 = vmatpush.msra.mxu0 0.0
    %1680 = vmatpush.msra.mxu0 0.0
    %1681 = vmatpush.msra.mxu0 0.0
    %1682 = vmatpush.msra.mxu0 0.0
    %1683 = vmatpush.msra.mxu0 0.0
    %1684 = vmatpush.msra.mxu0 0.0
    %1685 = vmatpush.msra.mxu0 0.0
    %1686 = vmatpush.msra.mxu0 0.0
    %1687 = vmatpush.msra.mxu0 0.0
    %1688 = vmatpush.msra.mxu0 0.0
    %1689 = vmatpush.msra.mxu0 %v107
    %1690 = vmatpush.msra.mxu0 %v105
    %1691 = vmatpush.msra.mxu0 %v103
    %1692 = vmatpush.msra.mxu0 %v101
    %1693 = vmatmul.f32.gmra.mxu0 %v1655
    %v1694 = vpop.f32.mrf.mxu0
    %v1695 = vadd.f32 %v1650, %v1694
    %1696 = vdwg.mxu0
    %v1697 = vadd.f32 %v1675, %v158
    %v1698 = vadd.f32 %v1695, %v159
    %v1699 = vxor.u32 %v1697, 2147483648
    %v1700 = vmul.f32 %v1699, 1.442695
    %v1701 = vpow.pop %v1700
    %v1702 = vadd.f32 %v1701, 1.0
    %v1703 = vrcp.pop %v1702
    %v1704 = vmul.f32 %v1702, %v1703
    %v1705 = vsub.f32 1.0, %v1704
    %v1706 = vmul.f32 %v1703, %v1705
    %v1707 = vadd.f32 %v1703, %v1706
    %vm1708 = vweird.f32 %v1702
    %vm1709 = vweird.f32 %v1703
    %vm1710 = vmor %vm1708, %vm1709
    %v1711 = vsel %vm1710, %v1703, %v1707
    %v1712 = vand.u32 2147483647, %v1702
    %vm1713 = vcmp.eq.f32.partialorder %v1712, 8.507059e+37
    %v1714 = vand.u32 %v1702, 2147483648
    %v1715 = vor.u32 1.1754944e-38, %v1714
    %v1716 = vsel %vm1713, %v1715, %v1711
    %v1717 = vmul.f32 1.0, %v1716
    %v1718 = vtanh.pop %v1698
    %v1719 = vxor.u32 %v1698, 2147483648
    %v1720 = vmul.f32 %v1719, 1.442695
    %v1721 = vpow.pop %v1720
    %v1722 = vadd.f32 %v1721, 1.0
    %v1723 = vrcp.pop %v1722
    %v1724 = vmul.f32 %v1722, %v1723
    %v1725 = vsub.f32 1.0, %v1724
    %v1726 = vmul.f32 %v1723, %v1725
    %v1727 = vadd.f32 %v1723, %v1726
    %vm1728 = vweird.f32 %v1722
    %vm1729 = vweird.f32 %v1723
    %vm1730 = vmor %vm1728, %vm1729
    %v1731 = vsel %vm1730, %v1723, %v1727
    %v1732 = vand.u32 2147483647, %v1722
    %vm1733 = vcmp.eq.f32.partialorder %v1732, 8.507059e+37
    %v1734 = vand.u32 %v1722, 2147483648
    %v1735 = vor.u32 1.1754944e-38, %v1734
    %v1736 = vsel %vm1733, %v1735, %v1731
    %v1737 = vmul.f32 1.0, %v1736
    %v1738 = vmul.f32 %v1717, %v1546
    %v1739 = vmul.f32 %v1717, %v1718
    %1741 = vrot.lane.b32.xlu0 %v1739, 64
    %v1742 = vpop.permute.xlu0 %1741
    %v1744 = vadd.f32 %v1738, %v1742
    %v1745 = vtanh.pop %v1744
    %v1746 = vmul.f32 %v1737, %v1745
    %v1747 = vld [vmem:[%s7] sm:$0xff]
    %v1748 = vld [vmem:[%s7 + $0x8] sm:$0xff]
    %v1749 = vld [vmem:[%s7 + $0x10] sm:$0xff]
    %v1750 = vld [vmem:[%s7 + $0x18] sm:$0xff]
    %v1751 = vld [vmem:[%s7 + $0x20] sm:$0xff]
    %v1752 = vld [vmem:[%s7 + $0x28] sm:$0xff]
    %v1753 = vld [vmem:[%s7 + $0x30] sm:$0xff]
    %v1754 = vld [vmem:[%s7 + $0x38] sm:$0xff]
    %v1755 = vld [vmem:[#allocation2] sm:$0x1]
    %v1757 = vperm.slane %v1755, 0
    %1760 = vrot.lane.b32.xlu0 %v1746, 64
    %v1761 = vpop.permute.xlu0 %1760
    %v1762 = vsel %vm223, %v1761, 0
    %1764 = vmatpush.msra.mxu0 0.0
    %1765 = vmatpush.msra.mxu0 0.0
    %1766 = vmatpush.msra.mxu0 0.0
    %1767 = vmatpush.msra.mxu0 0.0
    %1768 = vmatpush.msra.mxu0 0.0
    %1769 = vmatpush.msra.mxu0 0.0
    %1770 = vmatpush.msra.mxu0 0.0
    %1771 = vmatpush.msra.mxu0 0.0
    %1772 = vmatpush.msra.mxu0 %v1754
    %1773 = vmatpush.msra.mxu0 %v1753
    %1774 = vmatpush.msra.mxu0 %v1752
    %1775 = vmatpush.msra.mxu0 %v1751
    %1776 = vmatpush.msra.mxu0 %v1750
    %1777 = vmatpush.msra.mxu0 %v1749
    %1778 = vmatpush.msra.mxu0 %v1748
    %1779 = vmatpush.msra.mxu0 %v1747
    %1780 = vmatmul.f32.gmra.mxu0 %v422
    %v1781 = vpop.f32.mrf.mxu0
    %v1782 = vadd.f32 %v1757, %v1781
    %1783 = vmatmul.f32.gmra.mxu0 %v620
    %v1784 = vpop.f32.mrf.mxu0
    %v1785 = vadd.f32 %v1757, %v1784
    %1786 = vmatmul.f32.gmra.mxu0 %v818
    %v1787 = vpop.f32.mrf.mxu0
    %v1788 = vadd.f32 %v1757, %v1787
    %1789 = vmatmul.f32.gmra.mxu0 %v1016
    %v1790 = vpop.f32.mrf.mxu0
    %v1791 = vadd.f32 %v1757, %v1790
    %1792 = vmatmul.f32.gmra.mxu0 %v1214
    %v1793 = vpop.f32.mrf.mxu0
    %v1794 = vadd.f32 %v1757, %v1793
    %1795 = vmatmul.f32.gmra.mxu0 %v1412
    %v1796 = vpop.f32.mrf.mxu0
    %v1797 = vadd.f32 %v1757, %v1796
    %1798 = vmatmul.f32.gmra.mxu0 %v1610
    %v1799 = vpop.f32.mrf.mxu0
    %v1800 = vadd.f32 %v1757, %v1799
    %1801 = vmatmul.f32.gmra.mxu0 %v1762
    %v1802 = vpop.f32.mrf.mxu0
    %v1803 = vadd.f32 %v1757, %v1802
    %1804 = vdwg.mxu0
    %vm1805 = vcmask 7168
    %1806 = vst.msk [vmem:[%s9] sm:$0xff] %vm1805, %v1782
    %1807 = vst.msk [vmem:[%s9 + $0x8] sm:$0xff] %vm1805, %v1785
    %1808 = vst.msk [vmem:[%s9 + $0x10] sm:$0xff] %vm1805, %v1788
    %1809 = vst.msk [vmem:[%s9 + $0x18] sm:$0xff] %vm1805, %v1791
    %1810 = vst.msk [vmem:[%s9 + $0x20] sm:$0xff] %vm1805, %v1794
    %1811 = vst.msk [vmem:[%s9 + $0x28] sm:$0xff] %vm1805, %v1797
    %1812 = vst.msk [vmem:[%s9 + $0x30] sm:$0xff] %vm1805, %v1800
    %1813 = vst.msk [vmem:[%s9 + $0x38] sm:$0xff] %vm1805, %v1803
    // Predicated region
    $region54: #{tpu_custom_call.1} parent=1 // pred_check
      _
    $region55: #{tpu_custom_call.1} parent=1 // pred_check_branch
      %1815 = sbr.rel (0) target = $region57
    $region56: #{tpu_custom_call.1} parent=1 // pred_region
      _
    $region57: #{tpu_custom_call.1} parent=1 // pred_fallthru
      _
    // Predicated region
    $region58: #{tpu_custom_call.1} parent=1 // pred_check
      _
    $region59: #{tpu_custom_call.1} parent=1 // pred_check_branch
      %1817 = sbr.rel (0) target = $region61
    $region60: #{tpu_custom_call.1} parent=1 // pred_region
      _
    $region61: #{tpu_custom_call.1} parent=1 // pred_fallthru
      _
    %1818 = vsyncpa [#allocation4], 1
    %1819 = vsyncpa [#allocation6], 1
    %1820 = vsyncpa [#allocation9], 1

</llo_original>
